<compile_context>
chip_gen: v6e
topology: v6e:2x2x1
jax: 0.10.0
libtpu: 0.0.40
codegen_flags: <defaults>
</compile_context>

<pallas_src>
import functools

import jax
import jax.numpy as jnp
from jax import lax
from jax.experimental import pallas as pl
from jax.experimental.pallas import tpu as pltpu

_NEG = -1e30  # finite "minus infinity" sentinel


def _supcon_kernel(labq_ref, labk_ref, fq_ref, fk_ref,
                   loss_ref, single_ref,
                   m_sc, s_sc, p_sc, n_sc,
                   *, inv_temperature, batch_size, tm, tk):
    i = pl.program_id(0)   # query-row tile  ("parallel")
    k = pl.program_id(1)   # key-column tile ("arbitrary", innermost)

    @pl.when(k == 0)
    def _init():
        m_sc[...] = jnp.full((tm, 1), _NEG, jnp.float32)
        s_sc[...] = jnp.zeros((tm, 1), jnp.float32)
        p_sc[...] = jnp.zeros((tm, 1), jnp.float32)
        n_sc[...] = jnp.zeros((tm, 1), jnp.float32)

    # (TM, TK) tile of anchor_dot_contrast / T; contract both lane axes (MXU).
    adc = lax.dot_general(
        fq_ref[...], fk_ref[...],
        dimension_numbers=(((1,), (1,)), ((), ())),
        preferred_element_type=jnp.float32,
    ) * inv_temperature

    row_ids = i * tm + lax.broadcasted_iota(jnp.int32, (tm, 1), 0)
    col_ids = k * tk + lax.broadcasted_iota(jnp.int32, (1, tk), 1)
    valid = col_ids < batch_size                      # (1, TK) padding mask
    not_diag = jnp.logical_not(row_ids == col_ids)    # (TM, TK)

    # positives: same label, not self, not padding
    pos = jnp.where((labq_ref[...] == labk_ref[...]) & not_diag & valid,
                    1.0, 0.0)

    # running max over valid columns (diagonal included, like the reference)
    adc_v = jnp.where(valid, adc, _NEG)
    m_new = jnp.maximum(m_sc[...], jnp.max(adc_v, axis=1, keepdims=True))
    alpha = jnp.exp(m_sc[...] - m_new)

    # exp-sum excludes the diagonal and padded columns
    adc_e = jnp.where(not_diag & valid, adc, _NEG)
    s_sc[...] = alpha * s_sc[...] + jnp.sum(jnp.exp(adc_e - m_new),
                                            axis=1, keepdims=True)
    p_sc[...] = p_sc[...] + jnp.sum(pos * adc, axis=1, keepdims=True)
    n_sc[...] = n_sc[...] + jnp.sum(pos, axis=1, keepdims=True)
    m_sc[...] = m_new

    @pl.when(k == pl.num_programs(1) - 1)
    def _finalize():
        n = n_sc[...]
        single = jnp.where(n == 0.0, 1.0, 0.0)          # singleton rows
        log_z = m_sc[...] + jnp.log(s_sc[...])          # logsumexp (no diag)
        mean_log_prob_pos = (p_sc[...] - n * log_z) / (n + single)
        row_valid = jnp.where(row_ids < batch_size, 1.0, 0.0)   # (TM, 1)
        loss_ref[...] = -mean_log_prob_pos * (1.0 - single) * row_valid
        single_ref[...] = single * row_valid


def supcon_loss_clear(features, labels, temperature=0.07, *,
                      block_b=128, use_bf16_matmul=False):
    """Pallas implementation of SupConLoss_clear.forward (returns a scalar)."""
    B, D = features.shape
    bp = ((B + block_b - 1) // block_b) * block_b
    pad = bp - B

    feats = features.astype(jnp.float32)
    if pad:
        feats = jnp.pad(feats, ((0, pad), (0, 0)))
    if use_bf16_matmul:
        # bf16 inputs + f32 accumulation: ~3x MXU throughput on v6e/v7x.
        feats = feats.astype(jnp.bfloat16)

    lab = labels.astype(jnp.int32).reshape(B)
    if pad:
        lab = jnp.pad(lab, (0, pad), constant_values=-1)
    lab_col = lab.reshape(bp, 1)
    lab_row = lab.reshape(1, bp)

    grid = (bp // block_b, bp // block_b)
    kernel = functools.partial(
        _supcon_kernel,
        inv_temperature=float(1.0 / temperature),
        batch_size=B, tm=block_b, tk=block_b)

    loss_vec, single_vec = pl.pallas_call(
        kernel,
        out_shape=(jax.ShapeDtypeStruct((bp, 1), jnp.float32),
                   jax.ShapeDtypeStruct((bp, 1), jnp.float32)),
        grid_spec=pltpu.PrefetchScalarGridSpec(
            num_scalar_prefetch=0,
            grid=grid,
            in_specs=[
                pl.BlockSpec((block_b, 1), lambda i, k: (i, 0)),   # query labels
                pl.BlockSpec((1, block_b), lambda i, k: (0, k)),   # key labels
                pl.BlockSpec((block_b, D), lambda i, k: (i, 0)),   # query feats
                pl.BlockSpec((block_b, D), lambda i, k: (k, 0)),   # key feats
            ],
            out_specs=(
                pl.BlockSpec((block_b, 1), lambda i, k: (i, 0)),
                pl.BlockSpec((block_b, 1), lambda i, k: (i, 0)),
            ),
            scratch_shapes=[pltpu.VMEM((block_b, 1), jnp.float32)] * 4,
        ),
        compiler_params=pltpu.CompilerParams(
            dimension_semantics=("parallel", "arbitrary")),
    )(lab_col, lab_row, feats, feats)

    # Tiny final reduction (B elements) in plain JAX; matches the reference:
    # loss = loss.sum() / (B - single.sum())
    denom = jnp.float32(B) - jnp.sum(single_vec)
    return jnp.sum(loss_vec) / denom


def _reference_loss(features, labels, temperature=0.07):
    """Pure-JAX reference mirroring the PyTorch module exactly."""
    B = features.shape[0]
    lab = labels.reshape(-1, 1)
    mask = (lab == lab.T).astype(jnp.float32)
    adc = (features @ features.T) / temperature
    logits = adc - jnp.max(adc, axis=1, keepdims=True)
    logits_mask = 1.0 - jnp.eye(B, dtype=jnp.float32)
    mask = mask * logits_mask
    single = (mask.sum(1) == 0).astype(jnp.float32)
    exp_logits = jnp.exp(logits) * logits_mask
    log_prob = logits - jnp.log(exp_logits.sum(1, keepdims=True))
    mean_log_prob_pos = (mask * log_prob).sum(1) / (mask.sum(1) + single)
    loss = -mean_log_prob_pos * (1.0 - single)
    return loss.sum() / (B - single.sum())


if __name__ == "__main__":
    key = jax.random.PRNGKey(0)
    k1, k2, k3 = jax.random.split(key, 3)

    # Test 1: small batch with repeated classes and one singleton (label 3).
    B, D = 8, 32
    feats = jax.random.normal(k1, (B, D), dtype=jnp.float32)
    feats = feats / jnp.linalg.norm(feats, axis=1, keepdims=True)
    labels = jnp.array([0, 1, 0, 1, 2, 2, 3, 0], dtype=jnp.int32)
    loss = jax.block_until_ready(supcon_loss_clear(feats, labels, 0.07))
    ref = _reference_loss(feats, labels, 0.07)
    assert jnp.allclose(loss, ref, rtol=1e-4, atol=1e-4), (loss, ref)

    # Test 2: batch not a multiple of the tile (exercises padding + the
    # multi-tile flash-softmax path) with a forced singleton sample.
    B2, D2 = 200, 64
    f2 = jax.random.normal(k2, (B2, D2), dtype=jnp.float32)
    f2 = f2 / jnp.linalg.norm(f2, axis=1, keepdims=True)
    l2 = jax.random.randint(k3, (B2,), 0, 7, dtype=jnp.int32)
    l2 = l2.at[17].set(99)
    loss2 = jax.block_until_ready(supcon_loss_clear(f2, l2, 0.07))
    ref2 = _reference_loss(f2, l2, 0.07)
    assert jnp.allclose(loss2, ref2, rtol=1e-4, atol=1e-4), (loss2, ref2)

    print("KERNEL_OK")
</pallas_src>

<mosaic_0001>
module attributes {stable_mosaic.version = 11 : i64} {
  func.func @_supcon_kernel(%arg0: i32, %arg1: i32, %arg2: memref<128x1xi32, #tpu.memory_space<vmem>>, %arg3: memref<1x128xi32, #tpu.memory_space<vmem>>, %arg4: memref<128x32xf32, #tpu.memory_space<vmem>>, %arg5: memref<128x32xf32, #tpu.memory_space<vmem>>, %arg6: memref<128x1xf32, #tpu.memory_space<vmem>>, %arg7: memref<128x1xf32, #tpu.memory_space<vmem>>, %arg8: memref<128x1xf32, #tpu.memory_space<vmem>>, %arg9: memref<128x1xf32, #tpu.memory_space<vmem>>, %arg10: memref<128x1xf32, #tpu.memory_space<vmem>>, %arg11: memref<128x1xf32, #tpu.memory_space<vmem>>) attributes {dimension_semantics = [#tpu.dimension_semantics<parallel>, #tpu.dimension_semantics<arbitrary>], iteration_bounds = array<i64: 1, 1>, scalar_prefetch = 0 : i64, scratch_operands = 4 : i64, tpu.core_type = #tpu.core_type<tc>, window_params = [{transform_indices = @transform_0, window_bounds = array<i64: 128, 1>}, {transform_indices = @transform_1, window_bounds = array<i64: 1, 128>}, {transform_indices = @transform_2, window_bounds = array<i64: 128, 32>}, {transform_indices = @transform_3, window_bounds = array<i64: 128, 32>}, {transform_indices = @transform_4, window_bounds = array<i64: 128, 1>}, {transform_indices = @transform_5, window_bounds = array<i64: 128, 1>}]} {
    %c0_i32 = arith.constant 0 : i32
    %0 = arith.cmpi eq, %arg1, %c0_i32 : i32
    %1 = arith.extui %0 : i1 to i32
    %c0_i32_0 = arith.constant 0 : i32
    %2 = arith.cmpi ne, %1, %c0_i32_0 : i32
    scf.if %2 {
      %cst_39 = arith.constant -1.000000e+30 : f32
      %72 = vector.broadcast %cst_39 : f32 to vector<128x1xf32>
      %c0_40 = arith.constant 0 : index
      %c0_41 = arith.constant 0 : index
      %73 = vector.load %arg8[%c0_40, %c0_41] : memref<128x1xf32, #tpu.memory_space<vmem>>, vector<128x1xf32>
      tpu.vector_store %arg8[%c0_40, %c0_41], %72 {strides = array<i32>} : memref<128x1xf32, #tpu.memory_space<vmem>>, vector<128x1xf32>,
      %cst_42 = arith.constant 0.000000e+00 : f32
      %74 = vector.broadcast %cst_42 : f32 to vector<128x1xf32>
      %c0_43 = arith.constant 0 : index
      %c0_44 = arith.constant 0 : index
      %75 = vector.load %arg9[%c0_43, %c0_44] : memref<128x1xf32, #tpu.memory_space<vmem>>, vector<128x1xf32>
      tpu.vector_store %arg9[%c0_43, %c0_44], %74 {strides = array<i32>} : memref<128x1xf32, #tpu.memory_space<vmem>>, vector<128x1xf32>,
      %cst_45 = arith.constant 0.000000e+00 : f32
      %76 = vector.broadcast %cst_45 : f32 to vector<128x1xf32>
      %c0_46 = arith.constant 0 : index
      %c0_47 = arith.constant 0 : index
      %77 = vector.load %arg10[%c0_46, %c0_47] : memref<128x1xf32, #tpu.memory_space<vmem>>, vector<128x1xf32>
      tpu.vector_store %arg10[%c0_46, %c0_47], %76 {strides = array<i32>} : memref<128x1xf32, #tpu.memory_space<vmem>>, vector<128x1xf32>,
      %cst_48 = arith.constant 0.000000e+00 : f32
      %78 = vector.broadcast %cst_48 : f32 to vector<128x1xf32>
      %c0_49 = arith.constant 0 : index
      %c0_50 = arith.constant 0 : index
      %79 = vector.load %arg11[%c0_49, %c0_50] : memref<128x1xf32, #tpu.memory_space<vmem>>, vector<128x1xf32>
      tpu.vector_store %arg11[%c0_49, %c0_50], %78 {strides = array<i32>} : memref<128x1xf32, #tpu.memory_space<vmem>>, vector<128x1xf32>,
    } else {
    }
    %c0 = arith.constant 0 : index
    %c0_1 = arith.constant 0 : index
    %3 = vector.load %arg4[%c0, %c0_1] : memref<128x32xf32, #tpu.memory_space<vmem>>, vector<128x32xf32>
    %c0_2 = arith.constant 0 : index
    %c0_3 = arith.constant 0 : index
    %4 = vector.load %arg5[%c0_2, %c0_3] : memref<128x32xf32, #tpu.memory_space<vmem>>, vector<128x32xf32>
    %cst = arith.constant dense<0.000000e+00> : vector<128x128xf32>
    %5 = tpu.matmul %3, %4, %cst {dimension_numbers = #tpu.dot_dimension_numbers<[1], [1], [0], [0], [0, 0, 1, 0], [], []>} : vector<128x32xf32>, vector<128x32xf32>, vector<128x128xf32> -> vector<128x128xf32>
    %cst_4 = arith.constant 14.2857141 : f32
    %6 = vector.broadcast %cst_4 : f32 to vector<128x128xf32>
    %7 = arith.mulf %5, %6 : vector<128x128xf32>
    %c128_i32 = arith.constant 128 : i32
    %8 = arith.muli %arg0, %c128_i32 : i32
    %9 = tpu.iota {dimensions = array<i32: 0>} : vector<128x1xi32>
    %10 = vector.broadcast %8 : i32 to vector<128x1xi32>
    %11 = arith.addi %10, %9 : vector<128x1xi32>
    %c128_i32_5 = arith.constant 128 : i32
    %12 = arith.muli %arg1, %c128_i32_5 : i32
    %13 = tpu.iota {dimensions = array<i32: 1>} : vector<1x128xi32>
    %14 = vector.broadcast %12 : i32 to vector<1x128xi32>
    %15 = arith.addi %14, %13 : vector<1x128xi32>
    %c8_i32 = arith.constant 8 : i32
    %16 = vector.broadcast %c8_i32 : i32 to vector<1x128xi32>
    %17 = arith.cmpi slt, %15, %16 : vector<1x128xi32>
    %18 = vector.broadcast %11 : vector<128x1xi32> to vector<128x128xi32>
    %19 = vector.broadcast %15 : vector<1x128xi32> to vector<128x128xi32>
    %20 = arith.cmpi eq, %18, %19 : vector<128x128xi32>
    %cst_6 = arith.constant dense<true> : vector<128x128xi1>
    %21 = arith.xori %20, %cst_6 : vector<128x128xi1>
    %c0_7 = arith.constant 0 : index
    %c0_8 = arith.constant 0 : index
    %22 = vector.load %arg2[%c0_7, %c0_8] : memref<128x1xi32, #tpu.memory_space<vmem>>, vector<128x1xi32>
    %c0_9 = arith.constant 0 : index
    %c0_10 = arith.constant 0 : index
    %23 = vector.load %arg3[%c0_9, %c0_10] : memref<1x128xi32, #tpu.memory_space<vmem>>, vector<1x128xi32>
    %24 = vector.broadcast %22 : vector<128x1xi32> to vector<128x128xi32>
    %25 = vector.broadcast %23 : vector<1x128xi32> to vector<128x128xi32>
    %26 = arith.cmpi eq, %24, %25 : vector<128x128xi32>
    %27 = arith.andi %26, %21 : vector<128x128xi1>
    %28 = vector.broadcast %17 : vector<1x128xi1> to vector<128x128xi1>
    %29 = arith.andi %27, %28 : vector<128x128xi1>
    %cst_11 = arith.constant 1.000000e+00 : f32
    %cst_12 = arith.constant 0.000000e+00 : f32
    %30 = vector.broadcast %cst_11 : f32 to vector<128x128xf32>
    %31 = vector.broadcast %cst_12 : f32 to vector<128x128xf32>
    %32 = arith.select %29, %30, %31 : vector<128x128xi1>, vector<128x128xf32>
    %cst_13 = arith.constant -1.000000e+30 : f32
    %33 = vector.shape_cast %17 : vector<1x128xi1> to vector<1x128xi1>
    %34 = vector.broadcast %33 : vector<1x128xi1> to vector<128x128xi1>
    %35 = vector.broadcast %cst_13 : f32 to vector<128x128xf32>
    %36 = arith.select %34, %7, %35 : vector<128x128xi1>, vector<128x128xf32>
    %c0_14 = arith.constant 0 : index
    %c0_15 = arith.constant 0 : index
    %37 = vector.load %arg8[%c0_14, %c0_15] : memref<128x1xf32, #tpu.memory_space<vmem>>, vector<128x1xf32>
    %cst_16 = arith.constant dense<0xFF800000> : vector<128xf32>
    %38 = vector.multi_reduction <maximumf>, %36, %cst_16 [1] : vector<128x128xf32> to vector<128xf32>
    %39 = vector.shape_cast %38 : vector<128xf32> to vector<128x1xf32>
    %40 = arith.maximumf %37, %39 : vector<128x1xf32>
    %c0_17 = arith.constant 0 : index
    %c0_18 = arith.constant 0 : index
    %41 = vector.load %arg8[%c0_17, %c0_18] : memref<128x1xf32, #tpu.memory_space<vmem>>, vector<128x1xf32>
    %42 = arith.subf %41, %40 : vector<128x1xf32>
    %43 = math.exp %42 : vector<128x1xf32>
    %44 = vector.broadcast %17 : vector<1x128xi1> to vector<128x128xi1>
    %45 = arith.andi %21, %44 : vector<128x128xi1>
    %cst_19 = arith.constant -1.000000e+30 : f32
    %46 = vector.broadcast %cst_19 : f32 to vector<128x128xf32>
    %47 = arith.select %45, %7, %46 : vector<128x128xi1>, vector<128x128xf32>
    %c0_20 = arith.constant 0 : index
    %c0_21 = arith.constant 0 : index
    %48 = vector.load %arg9[%c0_20, %c0_21] : memref<128x1xf32, #tpu.memory_space<vmem>>, vector<128x1xf32>
    %49 = arith.mulf %43, %48 : vector<128x1xf32>
    %50 = vector.broadcast %40 : vector<128x1xf32> to vector<128x128xf32>
    %51 = arith.subf %47, %50 : vector<128x128xf32>
    %52 = math.exp %51 : vector<128x128xf32>
    %cst_22 = arith.constant dense<0.000000e+00> : vector<128xf32>
    %53 = vector.multi_reduction <add>, %52, %cst_22 [1] : vector<128x128xf32> to vector<128xf32>
    %54 = vector.shape_cast %53 : vector<128xf32> to vector<128x1xf32>
    %55 = arith.addf %49, %54 : vector<128x1xf32>
    %c0_23 = arith.constant 0 : index
    %c0_24 = arith.constant 0 : index
    %56 = vector.load %arg9[%c0_23, %c0_24] : memref<128x1xf32, #tpu.memory_space<vmem>>, vector<128x1xf32>
    tpu.vector_store %arg9[%c0_23, %c0_24], %55 {strides = array<i32>} : memref<128x1xf32, #tpu.memory_space<vmem>>, vector<128x1xf32>,
    %c0_25 = arith.constant 0 : index
    %c0_26 = arith.constant 0 : index
    %57 = vector.load %arg10[%c0_25, %c0_26] : memref<128x1xf32, #tpu.memory_space<vmem>>, vector<128x1xf32>
    %58 = arith.mulf %32, %7 : vector<128x128xf32>
    %cst_27 = arith.constant dense<0.000000e+00> : vector<128xf32>
    %59 = vector.multi_reduction <add>, %58, %cst_27 [1] : vector<128x128xf32> to vector<128xf32>
    %60 = vector.shape_cast %59 : vector<128xf32> to vector<128x1xf32>
    %61 = arith.addf %57, %60 : vector<128x1xf32>
    %c0_28 = arith.constant 0 : index
    %c0_29 = arith.constant 0 : index
    %62 = vector.load %arg10[%c0_28, %c0_29] : memref<128x1xf32, #tpu.memory_space<vmem>>, vector<128x1xf32>
    tpu.vector_store %arg10[%c0_28, %c0_29], %61 {strides = array<i32>} : memref<128x1xf32, #tpu.memory_space<vmem>>, vector<128x1xf32>,
    %c0_30 = arith.constant 0 : index
    %c0_31 = arith.constant 0 : index
    %63 = vector.load %arg11[%c0_30, %c0_31] : memref<128x1xf32, #tpu.memory_space<vmem>>, vector<128x1xf32>
    %cst_32 = arith.constant dense<0.000000e+00> : vector<128xf32>
    %64 = vector.multi_reduction <add>, %32, %cst_32 [1] : vector<128x128xf32> to vector<128xf32>
    %65 = vector.shape_cast %64 : vector<128xf32> to vector<128x1xf32>
    %66 = arith.addf %63, %65 : vector<128x1xf32>
    %c0_33 = arith.constant 0 : index
    %c0_34 = arith.constant 0 : index
    %67 = vector.load %arg11[%c0_33, %c0_34] : memref<128x1xf32, #tpu.memory_space<vmem>>, vector<128x1xf32>
    tpu.vector_store %arg11[%c0_33, %c0_34], %66 {strides = array<i32>} : memref<128x1xf32, #tpu.memory_space<vmem>>, vector<128x1xf32>,
    %c0_35 = arith.constant 0 : index
    %c0_36 = arith.constant 0 : index
    %68 = vector.load %arg8[%c0_35, %c0_36] : memref<128x1xf32, #tpu.memory_space<vmem>>, vector<128x1xf32>
    tpu.vector_store %arg8[%c0_35, %c0_36], %40 {strides = array<i32>} : memref<128x1xf32, #tpu.memory_space<vmem>>, vector<128x1xf32>,
    %c0_i32_37 = arith.constant 0 : i32
    %69 = arith.cmpi eq, %arg1, %c0_i32_37 : i32
    %70 = arith.extui %69 : i1 to i32
    %c0_i32_38 = arith.constant 0 : i32
    %71 = arith.cmpi ne, %70, %c0_i32_38 : i32
    scf.if %71 {
      %c0_39 = arith.constant 0 : index
      %c0_40 = arith.constant 0 : index
      %72 = vector.load %arg11[%c0_39, %c0_40] : memref<128x1xf32, #tpu.memory_space<vmem>>, vector<128x1xf32>
      %cst_41 = arith.constant 0.000000e+00 : f32
      %73 = vector.broadcast %cst_41 : f32 to vector<128x1xf32>
      %74 = arith.cmpf oeq, %72, %73 : vector<128x1xf32>
      %cst_42 = arith.constant 1.000000e+00 : f32
      %cst_43 = arith.constant 0.000000e+00 : f32
      %75 = vector.broadcast %cst_42 : f32 to vector<128x1xf32>
      %76 = vector.broadcast %cst_43 : f32 to vector<128x1xf32>
      %77 = arith.select %74, %75, %76 : vector<128x1xi1>, vector<128x1xf32>
      %c0_44 = arith.constant 0 : index
      %c0_45 = arith.constant 0 : index
      %78 = vector.load %arg8[%c0_44, %c0_45] : memref<128x1xf32, #tpu.memory_space<vmem>>, vector<128x1xf32>
      %c0_46 = arith.constant 0 : index
      %c0_47 = arith.constant 0 : index
      %79 = vector.load %arg9[%c0_46, %c0_47] : memref<128x1xf32, #tpu.memory_space<vmem>>, vector<128x1xf32>
      %80 = math.log %79 : vector<128x1xf32>
      %81 = arith.addf %78, %80 : vector<128x1xf32>
      %c0_48 = arith.constant 0 : index
      %c0_49 = arith.constant 0 : index
      %82 = vector.load %arg10[%c0_48, %c0_49] : memref<128x1xf32, #tpu.memory_space<vmem>>, vector<128x1xf32>
      %83 = arith.mulf %72, %81 : vector<128x1xf32>
      %84 = arith.subf %82, %83 : vector<128x1xf32>
      %85 = arith.addf %72, %77 : vector<128x1xf32>
      %86 = arith.divf %84, %85 : vector<128x1xf32>
      %c8_i32_50 = arith.constant 8 : i32
      %87 = vector.broadcast %c8_i32_50 : i32 to vector<128x1xi32>
      %88 = arith.cmpi slt, %11, %87 : vector<128x1xi32>
      %cst_51 = arith.constant 1.000000e+00 : f32
      %cst_52 = arith.constant 0.000000e+00 : f32
      %89 = vector.broadcast %cst_51 : f32 to vector<128x1xf32>
      %90 = vector.broadcast %cst_52 : f32 to vector<128x1xf32>
      %91 = arith.select %88, %89, %90 : vector<128x1xi1>, vector<128x1xf32>
      %cst_53 = arith.constant 0.000000e+00 : f32
      %92 = vector.broadcast %cst_53 : f32 to vector<128x1xf32>
      %93 = arith.subf %92, %86 : vector<128x1xf32>
      %cst_54 = arith.constant 1.000000e+00 : f32
      %94 = vector.broadcast %cst_54 : f32 to vector<128x1xf32>
      %95 = arith.subf %94, %77 : vector<128x1xf32>
      %96 = arith.mulf %93, %95 : vector<128x1xf32>
      %97 = arith.mulf %96, %91 : vector<128x1xf32>
      %c0_55 = arith.constant 0 : index
      %c0_56 = arith.constant 0 : index
      %98 = vector.load %arg6[%c0_55, %c0_56] : memref<128x1xf32, #tpu.memory_space<vmem>>, vector<128x1xf32>
      tpu.vector_store %arg6[%c0_55, %c0_56], %97 {strides = array<i32>} : memref<128x1xf32, #tpu.memory_space<vmem>>, vector<128x1xf32>,
      %99 = arith.mulf %77, %91 : vector<128x1xf32>
      %c0_57 = arith.constant 0 : index
      %c0_58 = arith.constant 0 : index
      %100 = vector.load %arg7[%c0_57, %c0_58] : memref<128x1xf32, #tpu.memory_space<vmem>>, vector<128x1xf32>
      tpu.vector_store %arg7[%c0_57, %c0_58], %99 {strides = array<i32>} : memref<128x1xf32, #tpu.memory_space<vmem>>, vector<128x1xf32>,
    } else {
    }
    return
  }
  func.func @transform_0(%arg0: i32, %arg1: i32) -> (i32, i32) {
    %c0_i32 = arith.constant 0 : i32
    %c0_i32_0 = arith.constant 0 : i32
    return %arg0, %c0_i32 : i32, i32
  }
  func.func @transform_1(%arg0: i32, %arg1: i32) -> (i32, i32) {
    %c0_i32 = arith.constant 0 : i32
    %c0_i32_0 = arith.constant 0 : i32
    return %c0_i32, %arg1 : i32, i32
  }
  func.func @transform_2(%arg0: i32, %arg1: i32) -> (i32, i32) {
    %c0_i32 = arith.constant 0 : i32
    %c0_i32_0 = arith.constant 0 : i32
    return %arg0, %c0_i32 : i32, i32
  }
  func.func @transform_3(%arg0: i32, %arg1: i32) -> (i32, i32) {
    %c0_i32 = arith.constant 0 : i32
    %c0_i32_0 = arith.constant 0 : i32
    return %arg1, %c0_i32 : i32, i32
  }
  func.func @transform_4(%arg0: i32, %arg1: i32) -> (i32, i32) {
    %c0_i32 = arith.constant 0 : i32
    %c0_i32_0 = arith.constant 0 : i32
    return %arg0, %c0_i32 : i32, i32
  }
  func.func @transform_5(%arg0: i32, %arg1: i32) -> (i32, i32) {
    %c0_i32 = arith.constant 0 : i32
    %c0_i32_0 = arith.constant 0 : i32
    return %arg0, %c0_i32 : i32, i32
  }
}

</mosaic_0001>

<llo_original>
// kernel: tpu_custom_call.1
$region0: #{tpu_custom_call.1}
  #allocation0 [shape = 'u32[]', space=smem, size = 0x4, offset = 0x4, fixed_abs, tag = 'smem constant byte address 0x4 - core index']
  #allocation1 [shape = 'u32[144,128]{1,0:T(1,128)}', space=vmem, size = 0x12000, scoped, tag = 'internal scratch']
  #allocation2 [shape = 'f32[128,1]{1,0:T(8,128)}', space=vmem, size = 0x10000, scoped, tag = 'scratch operand']
  #allocation3 [shape = 'f32[128,1]{1,0:T(8,128)}', space=vmem, size = 0x10000, scoped, tag = 'scratch operand']
  #allocation4 [shape = 'f32[128,1]{1,0:T(8,128)}', space=vmem, size = 0x10000, scoped, tag = 'scratch operand']
  #allocation5 [shape = 'f32[128,1]{1,0:T(8,128)}', space=vmem, size = 0x10000, scoped, tag = 'scratch operand']
  %s0 = inlined_call_operand.vmem [shape: s32[128,1], index: 0, kind: input, shape index: {}]
  %s1 = inlined_call_operand.vmem [shape: s32[1,128], index: 1, kind: input, shape index: {}]
  %s2 = inlined_call_operand.vmem [shape: f32[128,32], index: 2, kind: input, shape index: {}]
  %s3 = inlined_call_operand.vmem [shape: f32[128,32], index: 3, kind: input, shape index: {}]
  %s4 = inlined_call_operand.vmem [shape: f32[128,1], index: 4, kind: output, shape index: {0}]
  %s5 = inlined_call_operand.vmem [shape: f32[128,1], index: 5, kind: output, shape index: {1}]
  %6 = xla_tuple %s4, %s5
  %s7 = sld [smem:[#allocation0]]
  $region42: #{tpu_custom_call.1} parent=0
    _
  %s9 = ssub.s32 1, %s7
  %s10 = scalar_select 0, %s9, %s7
  // Predicated region
  $region2: #{tpu_custom_call.1} parent=0 // pred_check
    _
  $region3: #{tpu_custom_call.1} parent=0 // pred_check_branch
    %12 = sbr.rel (0) target = $region5
  $region4: #{tpu_custom_call.1} parent=0 // pred_region
    _
  $region5: #{tpu_custom_call.1} parent=0 // pred_fallthru
    _
  // Predicated region
  $region6: #{tpu_custom_call.1} parent=0 // pred_check
    _
  $region7: #{tpu_custom_call.1} parent=0 // pred_check_branch
    %14 = sbr.rel (0) target = $region9
  $region8: #{tpu_custom_call.1} parent=0 // pred_region
    _
  $region9: #{tpu_custom_call.1} parent=0 // pred_fallthru
    _
  // Predicated region
  $region10: #{tpu_custom_call.1} parent=0 // pred_check
    _
  $region11: #{tpu_custom_call.1} parent=0 // pred_check_branch
    %16 = sbr.rel (0) target = $region13
  $region12: #{tpu_custom_call.1} parent=0 // pred_region
    _
  $region13: #{tpu_custom_call.1} parent=0 // pred_fallthru
    _
  // Predicated region
  $region14: #{tpu_custom_call.1} parent=0 // pred_check
    _
  $region15: #{tpu_custom_call.1} parent=0 // pred_check_branch
    %18 = sbr.rel (0) target = $region17
  $region16: #{tpu_custom_call.1} parent=0 // pred_region
    _
  $region17: #{tpu_custom_call.1} parent=0 // pred_fallthru
    _
  %p19 = scmp.eq.s32.totalorder 0, 0
  // Predicated region
  $region18: #{tpu_custom_call.1} parent=0 // pred_check
    %p20 = pneg %p19
  $region19: #{tpu_custom_call.1} parent=0 // pred_check_branch
    %22 = sbr.rel (%p20) target = $region21
  $region20: #{tpu_custom_call.1} parent=0 // pred_region
    %vm23 = vcmask 7168
    %24 = vst.msk [vmem:[#allocation2] sm:$0xff] %vm23, -1e+30
    %25 = vst.msk [vmem:[#allocation2 + $0x8] sm:$0xff] %vm23, -1e+30
    %26 = vst.msk [vmem:[#allocation2 + $0x10] sm:$0xff] %vm23, -1e+30
    %27 = vst.msk [vmem:[#allocation2 + $0x18] sm:$0xff] %vm23, -1e+30
    %28 = vst.msk [vmem:[#allocation2 + $0x20] sm:$0xff] %vm23, -1e+30
    %29 = vst.msk [vmem:[#allocation2 + $0x28] sm:$0xff] %vm23, -1e+30
    %30 = vst.msk [vmem:[#allocation2 + $0x30] sm:$0xff] %vm23, -1e+30
    %31 = vst.msk [vmem:[#allocation2 + $0x38] sm:$0xff] %vm23, -1e+30
    %32 = vst.msk [vmem:[#allocation2 + $0x40] sm:$0xff] %vm23, -1e+30
    %33 = vst.msk [vmem:[#allocation2 + $0x48] sm:$0xff] %vm23, -1e+30
    %34 = vst.msk [vmem:[#allocation2 + $0x50] sm:$0xff] %vm23, -1e+30
    %35 = vst.msk [vmem:[#allocation2 + $0x58] sm:$0xff] %vm23, -1e+30
    %36 = vst.msk [vmem:[#allocation2 + $0x60] sm:$0xff] %vm23, -1e+30
    %37 = vst.msk [vmem:[#allocation2 + $0x68] sm:$0xff] %vm23, -1e+30
    %38 = vst.msk [vmem:[#allocation2 + $0x70] sm:$0xff] %vm23, -1e+30
    %39 = vst.msk [vmem:[#allocation2 + $0x78] sm:$0xff] %vm23, -1e+30
    %40 = vst.msk [vmem:[#allocation3] sm:$0xff] %vm23, 0.0
    %41 = vst.msk [vmem:[#allocation3 + $0x8] sm:$0xff] %vm23, 0.0
    %42 = vst.msk [vmem:[#allocation3 + $0x10] sm:$0xff] %vm23, 0.0
    %43 = vst.msk [vmem:[#allocation3 + $0x18] sm:$0xff] %vm23, 0.0
    %44 = vst.msk [vmem:[#allocation3 + $0x20] sm:$0xff] %vm23, 0.0
    %45 = vst.msk [vmem:[#allocation3 + $0x28] sm:$0xff] %vm23, 0.0
    %46 = vst.msk [vmem:[#allocation3 + $0x30] sm:$0xff] %vm23, 0.0
    %47 = vst.msk [vmem:[#allocation3 + $0x38] sm:$0xff] %vm23, 0.0
    %48 = vst.msk [vmem:[#allocation3 + $0x40] sm:$0xff] %vm23, 0.0
    %49 = vst.msk [vmem:[#allocation3 + $0x48] sm:$0xff] %vm23, 0.0
    %50 = vst.msk [vmem:[#allocation3 + $0x50] sm:$0xff] %vm23, 0.0
    %51 = vst.msk [vmem:[#allocation3 + $0x58] sm:$0xff] %vm23, 0.0
    %52 = vst.msk [vmem:[#allocation3 + $0x60] sm:$0xff] %vm23, 0.0
    %53 = vst.msk [vmem:[#allocation3 + $0x68] sm:$0xff] %vm23, 0.0
    %54 = vst.msk [vmem:[#allocation3 + $0x70] sm:$0xff] %vm23, 0.0
    %55 = vst.msk [vmem:[#allocation3 + $0x78] sm:$0xff] %vm23, 0.0
    %56 = vst.msk [vmem:[#allocation4] sm:$0xff] %vm23, 0.0
    %57 = vst.msk [vmem:[#allocation4 + $0x8] sm:$0xff] %vm23, 0.0
    %58 = vst.msk [vmem:[#allocation4 + $0x10] sm:$0xff] %vm23, 0.0
    %59 = vst.msk [vmem:[#allocation4 + $0x18] sm:$0xff] %vm23, 0.0
    %60 = vst.msk [vmem:[#allocation4 + $0x20] sm:$0xff] %vm23, 0.0
    %61 = vst.msk [vmem:[#allocation4 + $0x28] sm:$0xff] %vm23, 0.0
    %62 = vst.msk [vmem:[#allocation4 + $0x30] sm:$0xff] %vm23, 0.0
    %63 = vst.msk [vmem:[#allocation4 + $0x38] sm:$0xff] %vm23, 0.0
    %64 = vst.msk [vmem:[#allocation4 + $0x40] sm:$0xff] %vm23, 0.0
    %65 = vst.msk [vmem:[#allocation4 + $0x48] sm:$0xff] %vm23, 0.0
    %66 = vst.msk [vmem:[#allocation4 + $0x50] sm:$0xff] %vm23, 0.0
    %67 = vst.msk [vmem:[#allocation4 + $0x58] sm:$0xff] %vm23, 0.0
    %68 = vst.msk [vmem:[#allocation4 + $0x60] sm:$0xff] %vm23, 0.0
    %69 = vst.msk [vmem:[#allocation4 + $0x68] sm:$0xff] %vm23, 0.0
    %70 = vst.msk [vmem:[#allocation4 + $0x70] sm:$0xff] %vm23, 0.0
    %71 = vst.msk [vmem:[#allocation4 + $0x78] sm:$0xff] %vm23, 0.0
    %72 = vst.msk [vmem:[#allocation5] sm:$0xff] %vm23, 0.0
    %73 = vst.msk [vmem:[#allocation5 + $0x8] sm:$0xff] %vm23, 0.0
    %74 = vst.msk [vmem:[#allocation5 + $0x10] sm:$0xff] %vm23, 0.0
    %75 = vst.msk [vmem:[#allocation5 + $0x18] sm:$0xff] %vm23, 0.0
    %76 = vst.msk [vmem:[#allocation5 + $0x20] sm:$0xff] %vm23, 0.0
    %77 = vst.msk [vmem:[#allocation5 + $0x28] sm:$0xff] %vm23, 0.0
    %78 = vst.msk [vmem:[#allocation5 + $0x30] sm:$0xff] %vm23, 0.0
    %79 = vst.msk [vmem:[#allocation5 + $0x38] sm:$0xff] %vm23, 0.0
    %80 = vst.msk [vmem:[#allocation5 + $0x40] sm:$0xff] %vm23, 0.0
    %81 = vst.msk [vmem:[#allocation5 + $0x48] sm:$0xff] %vm23, 0.0
    %82 = vst.msk [vmem:[#allocation5 + $0x50] sm:$0xff] %vm23, 0.0
    %83 = vst.msk [vmem:[#allocation5 + $0x58] sm:$0xff] %vm23, 0.0
    %84 = vst.msk [vmem:[#allocation5 + $0x60] sm:$0xff] %vm23, 0.0
    %85 = vst.msk [vmem:[#allocation5 + $0x68] sm:$0xff] %vm23, 0.0
    %86 = vst.msk [vmem:[#allocation5 + $0x70] sm:$0xff] %vm23, 0.0
    %87 = vst.msk [vmem:[#allocation5 + $0x78] sm:$0xff] %vm23, 0.0
  $region21: #{tpu_custom_call.1} parent=0 // pred_fallthru
    _
  %v88 = vld [vmem:[%s2] sm:$0xff]
  %v89 = vld [vmem:[%s2 + $0x8] sm:$0xff]
  %v90 = vld [vmem:[%s2 + $0x10] sm:$0xff]
  %v91 = vld [vmem:[%s2 + $0x18] sm:$0xff]
  %v92 = vld [vmem:[%s2 + $0x20] sm:$0xff]
  %v93 = vld [vmem:[%s2 + $0x28] sm:$0xff]
  %v94 = vld [vmem:[%s2 + $0x30] sm:$0xff]
  %v95 = vld [vmem:[%s2 + $0x38] sm:$0xff]
  %v96 = vld [vmem:[%s2 + $0x40] sm:$0xff]
  %v97 = vld [vmem:[%s2 + $0x48] sm:$0xff]
  %v98 = vld [vmem:[%s2 + $0x50] sm:$0xff]
  %v99 = vld [vmem:[%s2 + $0x58] sm:$0xff]
  %v100 = vld [vmem:[%s2 + $0x60] sm:$0xff]
  %v101 = vld [vmem:[%s2 + $0x68] sm:$0xff]
  %v102 = vld [vmem:[%s2 + $0x70] sm:$0xff]
  %v103 = vld [vmem:[%s2 + $0x78] sm:$0xff]
  %v104 = vld [vmem:[%s3] sm:$0xff]
  %v105 = vld [vmem:[%s3 + $0x8] sm:$0xff]
  %v106 = vld [vmem:[%s3 + $0x10] sm:$0xff]
  %v107 = vld [vmem:[%s3 + $0x18] sm:$0xff]
  %v108 = vld [vmem:[%s3 + $0x20] sm:$0xff]
  %v109 = vld [vmem:[%s3 + $0x28] sm:$0xff]
  %v110 = vld [vmem:[%s3 + $0x30] sm:$0xff]
  %v111 = vld [vmem:[%s3 + $0x38] sm:$0xff]
  %v112 = vld [vmem:[%s3 + $0x40] sm:$0xff]
  %v113 = vld [vmem:[%s3 + $0x48] sm:$0xff]
  %v114 = vld [vmem:[%s3 + $0x50] sm:$0xff]
  %v115 = vld [vmem:[%s3 + $0x58] sm:$0xff]
  %v116 = vld [vmem:[%s3 + $0x60] sm:$0xff]
  %v117 = vld [vmem:[%s3 + $0x68] sm:$0xff]
  %v118 = vld [vmem:[%s3 + $0x70] sm:$0xff]
  %v119 = vld [vmem:[%s3 + $0x78] sm:$0xff]
  %vm120 = vcmask 261120
  %v122 = vsel %vm120, %v88, 0
  %v125 = vsel %vm120, %v89, 0
  %v128 = vsel %vm120, %v90, 0
  %v131 = vsel %vm120, %v91, 0
  %v134 = vsel %vm120, %v92, 0
  %v137 = vsel %vm120, %v93, 0
  %v140 = vsel %vm120, %v94, 0
  %v143 = vsel %vm120, %v95, 0
  %v146 = vsel %vm120, %v96, 0
  %v149 = vsel %vm120, %v97, 0
  %v152 = vsel %vm120, %v98, 0
  %v155 = vsel %vm120, %v99, 0
  %v158 = vsel %vm120, %v100, 0
  %v161 = vsel %vm120, %v101, 0
  %v164 = vsel %vm120, %v102, 0
  %v167 = vsel %vm120, %v103, 0
  %v170 = vsel %vm120, %v104, 0
  %v173 = vsel %vm120, %v105, 0
  %v176 = vsel %vm120, %v106, 0
  %v179 = vsel %vm120, %v107, 0
  %v182 = vsel %vm120, %v108, 0
  %v185 = vsel %vm120, %v109, 0
  %v188 = vsel %vm120, %v110, 0
  %v191 = vsel %vm120, %v111, 0
  %v194 = vsel %vm120, %v112, 0
  %v197 = vsel %vm120, %v113, 0
  %v200 = vsel %vm120, %v114, 0
  %v203 = vsel %vm120, %v115, 0
  %v206 = vsel %vm120, %v116, 0
  %v209 = vsel %vm120, %v117, 0
  %v212 = vsel %vm120, %v118, 0
  %v215 = vsel %vm120, %v119, 0
  %217 = vmatprep.subr.mxu0 0.0
  %218 = vmatpush1.xpose.msra.mxu0 %v215
  %219 = vmatprep.subr.mxu0 0.0
  %220 = vmatpush1.xpose.msra.mxu0 %v212
  %221 = vmatprep.subr.mxu0 0.0
  %222 = vmatpush1.xpose.msra.mxu0 %v209
  %223 = vmatprep.subr.mxu0 0.0
  %224 = vmatpush1.xpose.msra.mxu0 %v206
  %225 = vmatprep.subr.mxu0 0.0
  %226 = vmatpush1.xpose.msra.mxu0 %v203
  %227 = vmatprep.subr.mxu0 0.0
  %228 = vmatpush1.xpose.msra.mxu0 %v200
  %229 = vmatprep.subr.mxu0 0.0
  %230 = vmatpush1.xpose.msra.mxu0 %v197
  %231 = vmatprep.subr.mxu0 0.0
  %232 = vmatpush1.xpose.msra.mxu0 %v194
  %233 = vmatprep.subr.mxu0 0.0
  %234 = vmatpush1.xpose.msra.mxu0 %v191
  %235 = vmatprep.subr.mxu0 0.0
  %236 = vmatpush1.xpose.msra.mxu0 %v188
  %237 = vmatprep.subr.mxu0 0.0
  %238 = vmatpush1.xpose.msra.mxu0 %v185
  %239 = vmatprep.subr.mxu0 0.0
  %240 = vmatpush1.xpose.msra.mxu0 %v182
  %241 = vmatprep.subr.mxu0 0.0
  %242 = vmatpush1.xpose.msra.mxu0 %v179
  %243 = vmatprep.subr.mxu0 0.0
  %244 = vmatpush1.xpose.msra.mxu0 %v176
  %245 = vmatprep.subr.mxu0 0.0
  %246 = vmatpush1.xpose.msra.mxu0 %v173
  %247 = vmatprep.subr.mxu0 0.0
  %248 = vmatpush1.xpose.msra.mxu0 %v170
  %249 = vmatprep.subr.mxu0 0.0
  %250 = vmatpush2.xpose.msra.mxu0 0.0
  %251 = vmatprep.subr.mxu0 0.0
  %252 = vmatpush2.xpose.msra.mxu0 0.0
  %253 = vmatprep.subr.mxu0 0.0
  %254 = vmatpush2.xpose.msra.mxu0 0.0
  %255 = vmatprep.subr.mxu0 0.0
  %256 = vmatpush2.xpose.msra.mxu0 0.0
  %257 = vmatprep.subr.mxu0 0.0
  %258 = vmatpush2.xpose.msra.mxu0 0.0
  %259 = vmatprep.subr.mxu0 0.0
  %260 = vmatpush2.xpose.msra.mxu0 0.0
  %261 = vmatprep.subr.mxu0 0.0
  %262 = vmatpush2.xpose.msra.mxu0 0.0
  %263 = vmatprep.subr.mxu0 0.0
  %264 = vmatpush2.xpose.msra.mxu0 0.0
  %265 = vmatprep.subr.mxu0 0.0
  %266 = vmatpush2.xpose.msra.mxu0 0.0
  %267 = vmatprep.subr.mxu0 0.0
  %268 = vmatpush2.xpose.msra.mxu0 0.0
  %269 = vmatprep.subr.mxu0 0.0
  %270 = vmatpush2.xpose.msra.mxu0 0.0
  %271 = vmatprep.subr.mxu0 0.0
  %272 = vmatpush2.xpose.msra.mxu0 0.0
  %273 = vmatprep.subr.mxu0 0.0
  %274 = vmatpush2.xpose.msra.mxu0 0.0
  %275 = vmatprep.subr.mxu0 0.0
  %276 = vmatpush2.xpose.msra.mxu0 0.0
  %277 = vmatprep.subr.mxu0 0.0
  %278 = vmatpush2.xpose.msra.mxu0 0.0
  %279 = vmatprep.subr.mxu0 0.0
  %280 = vmatpush2.xpose.msra.mxu0 0.0
  %281 = vmatprep.mubr.f32.mxu0 0.0
  %282 = vmatmul.mubr.f32.gmra.mxu0 %v122
  %v283 = vpop.f32.mrf.mxu0
  %v284 = vadd.f32 0.0, %v283
  %v285 = vpop.f32.mrf.mxu0
  %286 = vmatprep.mubr.f32.mxu0 0.0
  %287 = vmatmul.mubr.f32.gmra.mxu0 %v125
  %v288 = vpop.f32.mrf.mxu0
  %v289 = vadd.f32 0.0, %v288
  %v290 = vpop.f32.mrf.mxu0
  %291 = vmatprep.mubr.f32.mxu0 0.0
  %292 = vmatmul.mubr.f32.gmra.mxu0 %v128
  %v293 = vpop.f32.mrf.mxu0
  %v294 = vadd.f32 0.0, %v293
  %v295 = vpop.f32.mrf.mxu0
  %296 = vmatprep.mubr.f32.mxu0 0.0
  %297 = vmatmul.mubr.f32.gmra.mxu0 %v131
  %v298 = vpop.f32.mrf.mxu0
  %v299 = vadd.f32 0.0, %v298
  %v300 = vpop.f32.mrf.mxu0
  %301 = vmatprep.mubr.f32.mxu0 0.0
  %302 = vmatmul.mubr.f32.gmra.mxu0 %v134
  %v303 = vpop.f32.mrf.mxu0
  %v304 = vadd.f32 0.0, %v303
  %v305 = vpop.f32.mrf.mxu0
  %306 = vmatprep.mubr.f32.mxu0 0.0
  %307 = vmatmul.mubr.f32.gmra.mxu0 %v137
  %v308 = vpop.f32.mrf.mxu0
  %v309 = vadd.f32 0.0, %v308
  %v310 = vpop.f32.mrf.mxu0
  %311 = vmatprep.mubr.f32.mxu0 0.0
  %312 = vmatmul.mubr.f32.gmra.mxu0 %v140
  %v313 = vpop.f32.mrf.mxu0
  %v314 = vadd.f32 0.0, %v313
  %v315 = vpop.f32.mrf.mxu0
  %316 = vmatprep.mubr.f32.mxu0 0.0
  %317 = vmatmul.mubr.f32.gmra.mxu0 %v143
  %v318 = vpop.f32.mrf.mxu0
  %v319 = vadd.f32 0.0, %v318
  %v320 = vpop.f32.mrf.mxu0
  %321 = vmatprep.mubr.f32.mxu0 0.0
  %322 = vmatmul.mubr.f32.gmra.mxu0 %v146
  %v323 = vpop.f32.mrf.mxu0
  %v324 = vadd.f32 0.0, %v323
  %v325 = vpop.f32.mrf.mxu0
  %326 = vmatprep.mubr.f32.mxu0 0.0
  %327 = vmatmul.mubr.f32.gmra.mxu0 %v149
  %v328 = vpop.f32.mrf.mxu0
  %v329 = vadd.f32 0.0, %v328
  %v330 = vpop.f32.mrf.mxu0
  %331 = vmatprep.mubr.f32.mxu0 0.0
  %332 = vmatmul.mubr.f32.gmra.mxu0 %v152
  %v333 = vpop.f32.mrf.mxu0
  %v334 = vadd.f32 0.0, %v333
  %v335 = vpop.f32.mrf.mxu0
  %336 = vmatprep.mubr.f32.mxu0 0.0
  %337 = vmatmul.mubr.f32.gmra.mxu0 %v155
  %v338 = vpop.f32.mrf.mxu0
  %v339 = vadd.f32 0.0, %v338
  %v340 = vpop.f32.mrf.mxu0
  %341 = vmatprep.mubr.f32.mxu0 0.0
  %342 = vmatmul.mubr.f32.gmra.mxu0 %v158
  %v343 = vpop.f32.mrf.mxu0
  %v344 = vadd.f32 0.0, %v343
  %v345 = vpop.f32.mrf.mxu0
  %346 = vmatprep.mubr.f32.mxu0 0.0
  %347 = vmatmul.mubr.f32.gmra.mxu0 %v161
  %v348 = vpop.f32.mrf.mxu0
  %v349 = vadd.f32 0.0, %v348
  %v350 = vpop.f32.mrf.mxu0
  %351 = vmatprep.mubr.f32.mxu0 0.0
  %352 = vmatmul.mubr.f32.gmra.mxu0 %v164
  %v353 = vpop.f32.mrf.mxu0
  %v354 = vadd.f32 0.0, %v353
  %v355 = vpop.f32.mrf.mxu0
  %356 = vmatprep.mubr.f32.mxu0 0.0
  %357 = vmatmul.mubr.f32.gmra.mxu0 %v167
  %v358 = vpop.f32.mrf.mxu0
  %v359 = vadd.f32 0.0, %v358
  %v360 = vpop.f32.mrf.mxu0
  %361 = vdwg.mxu0
  %v362 = vmul.f32 %v284, 14.285714
  %v363 = vmul.f32 %v289, 14.285714
  %v364 = vmul.f32 %v294, 14.285714
  %v365 = vmul.f32 %v299, 14.285714
  %v366 = vmul.f32 %v304, 14.285714
  %v367 = vmul.f32 %v309, 14.285714
  %v368 = vmul.f32 %v314, 14.285714
  %v369 = vmul.f32 %v319, 14.285714
  %v370 = vmul.f32 %v324, 14.285714
  %v371 = vmul.f32 %v329, 14.285714
  %v372 = vmul.f32 %v334, 14.285714
  %v373 = vmul.f32 %v339, 14.285714
  %v374 = vmul.f32 %v344, 14.285714
  %v375 = vmul.f32 %v349, 14.285714
  %v376 = vmul.f32 %v354, 14.285714
  %v377 = vmul.f32 %v359, 14.285714
  %s378 = smul.u32 0, 128
  %v379 = vlaneseq
  %v380 = vshrl.u32 %v379, 7
  %v381 = vadd.s32 %v380, 8
  %v382 = vadd.s32 %v380, 16
  %v383 = vadd.s32 %v380, 24
  %v384 = vadd.s32 %v380, 32
  %v385 = vadd.s32 %v380, 40
  %v386 = vadd.s32 %v380, 48
  %v387 = vadd.s32 %v380, 56
  %v388 = vadd.s32 %v380, 64
  %v389 = vadd.s32 %v380, 72
  %v390 = vadd.s32 %v380, 80
  %v391 = vadd.s32 %v380, 88
  %v392 = vadd.s32 %v380, 96
  %v393 = vadd.s32 %v380, 104
  %v394 = vadd.s32 %v380, 112
  %v395 = vadd.s32 %v380, 120
  %v396 = vstv %s378
  %v397 = vadd.s32 %v396, %v380
  %v398 = vadd.s32 %v396, %v381
  %v399 = vadd.s32 %v396, %v382
  %v400 = vadd.s32 %v396, %v383
  %v401 = vadd.s32 %v396, %v384
  %v402 = vadd.s32 %v396, %v385
  %v403 = vadd.s32 %v396, %v386
  %v404 = vadd.s32 %v396, %v387
  %v405 = vadd.s32 %v396, %v388
  %v406 = vadd.s32 %v396, %v389
  %v407 = vadd.s32 %v396, %v390
  %v408 = vadd.s32 %v396, %v391
  %v409 = vadd.s32 %v396, %v392
  %v410 = vadd.s32 %v396, %v393
  %v411 = vadd.s32 %v396, %v394
  %v412 = vadd.s32 %v396, %v395
  %s413 = smul.u32 0, 128
  %v414 = vlaneseq
  %v415 = vand.u32 %v414, 127
  %v416 = vstv %s413
  %v417 = vadd.s32 %v416, %v415
  %vm418 = vcmp.lt.s32.totalorder %v417, 8
  %vm419 = vcmp.eq.s32.totalorder %v397, %v417
  %vm420 = vcmp.eq.s32.totalorder %v398, %v417
  %vm421 = vcmp.eq.s32.totalorder %v399, %v417
  %vm422 = vcmp.eq.s32.totalorder %v400, %v417
  %vm423 = vcmp.eq.s32.totalorder %v401, %v417
  %vm424 = vcmp.eq.s32.totalorder %v402, %v417
  %vm425 = vcmp.eq.s32.totalorder %v403, %v417
  %vm426 = vcmp.eq.s32.totalorder %v404, %v417
  %vm427 = vcmp.eq.s32.totalorder %v405, %v417
  %vm428 = vcmp.eq.s32.totalorder %v406, %v417
  %vm429 = vcmp.eq.s32.totalorder %v407, %v417
  %vm430 = vcmp.eq.s32.totalorder %v408, %v417
  %vm431 = vcmp.eq.s32.totalorder %v409, %v417
  %vm432 = vcmp.eq.s32.totalorder %v410, %v417
  %vm433 = vcmp.eq.s32.totalorder %v411, %v417
  %vm434 = vcmp.eq.s32.totalorder %v412, %v417
  %vm435 = vmxor %vm419, 1
  %vm436 = vmxor %vm420, 1
  %vm437 = vmxor %vm421, 1
  %vm438 = vmxor %vm422, 1
  %vm439 = vmxor %vm423, 1
  %vm440 = vmxor %vm424, 1
  %vm441 = vmxor %vm425, 1
  %vm442 = vmxor %vm426, 1
  %vm443 = vmxor %vm427, 1
  %vm444 = vmxor %vm428, 1
  %vm445 = vmxor %vm429, 1
  %vm446 = vmxor %vm430, 1
  %vm447 = vmxor %vm431, 1
  %vm448 = vmxor %vm432, 1
  %vm449 = vmxor %vm433, 1
  %vm450 = vmxor %vm434, 1
  %v451 = vld [vmem:[%s0] sm:$0xff]
  %v452 = vld [vmem:[%s0 + $0x8] sm:$0xff]
  %v453 = vld [vmem:[%s0 + $0x10] sm:$0xff]
  %v454 = vld [vmem:[%s0 + $0x18] sm:$0xff]
  %v455 = vld [vmem:[%s0 + $0x20] sm:$0xff]
  %v456 = vld [vmem:[%s0 + $0x28] sm:$0xff]
  %v457 = vld [vmem:[%s0 + $0x30] sm:$0xff]
  %v458 = vld [vmem:[%s0 + $0x38] sm:$0xff]
  %v459 = vld [vmem:[%s0 + $0x40] sm:$0xff]
  %v460 = vld [vmem:[%s0 + $0x48] sm:$0xff]
  %v461 = vld [vmem:[%s0 + $0x50] sm:$0xff]
  %v462 = vld [vmem:[%s0 + $0x58] sm:$0xff]
  %v463 = vld [vmem:[%s0 + $0x60] sm:$0xff]
  %v464 = vld [vmem:[%s0 + $0x68] sm:$0xff]
  %v465 = vld [vmem:[%s0 + $0x70] sm:$0xff]
  %v466 = vld [vmem:[%s0 + $0x78] sm:$0xff]
  %v467 = vld [vmem:[%s1] sm:$0x1]
  %468 = vset.pattern.permute.xlu0 0
  %469 = vperm.xlu0 %468, %v451
  %v470 = vpop.permute.xlu0 %469
  %471 = vset.pattern.permute.xlu0 0
  %472 = vperm.xlu0 %471, %v452
  %v473 = vpop.permute.xlu0 %472
  %474 = vset.pattern.permute.xlu0 0
  %475 = vperm.xlu0 %474, %v453
  %v476 = vpop.permute.xlu0 %475
  %477 = vset.pattern.permute.xlu0 0
  %478 = vperm.xlu0 %477, %v454
  %v479 = vpop.permute.xlu0 %478
  %480 = vset.pattern.permute.xlu0 0
  %481 = vperm.xlu0 %480, %v455
  %v482 = vpop.permute.xlu0 %481
  %483 = vset.pattern.permute.xlu0 0
  %484 = vperm.xlu0 %483, %v456
  %v485 = vpop.permute.xlu0 %484
  %486 = vset.pattern.permute.xlu0 0
  %487 = vperm.xlu0 %486, %v457
  %v488 = vpop.permute.xlu0 %487
  %489 = vset.pattern.permute.xlu0 0
  %490 = vperm.xlu0 %489, %v458
  %v491 = vpop.permute.xlu0 %490
  %492 = vset.pattern.permute.xlu0 0
  %493 = vperm.xlu0 %492, %v459
  %v494 = vpop.permute.xlu0 %493
  %495 = vset.pattern.permute.xlu0 0
  %496 = vperm.xlu0 %495, %v460
  %v497 = vpop.permute.xlu0 %496
  %498 = vset.pattern.permute.xlu0 0
  %499 = vperm.xlu0 %498, %v461
  %v500 = vpop.permute.xlu0 %499
  %501 = vset.pattern.permute.xlu0 0
  %502 = vperm.xlu0 %501, %v462
  %v503 = vpop.permute.xlu0 %502
  %504 = vset.pattern.permute.xlu0 0
  %505 = vperm.xlu0 %504, %v463
  %v506 = vpop.permute.xlu0 %505
  %507 = vset.pattern.permute.xlu0 0
  %508 = vperm.xlu0 %507, %v464
  %v509 = vpop.permute.xlu0 %508
  %510 = vset.pattern.permute.xlu0 0
  %511 = vperm.xlu0 %510, %v465
  %v512 = vpop.permute.xlu0 %511
  %513 = vset.pattern.permute.xlu0 0
  %514 = vperm.xlu0 %513, %v466
  %v515 = vpop.permute.xlu0 %514
  %v516 = vlaneseq
  %v517 = vshrl.u32 %v516, 7
  %v518 = vsub.s32 0, %v517
  %v519 = vrot.slane %v467, %v518
  %vm520 = vcmp.eq.s32.totalorder %v470, %v519
  %vm521 = vcmp.eq.s32.totalorder %v473, %v519
  %vm522 = vcmp.eq.s32.totalorder %v476, %v519
  %vm523 = vcmp.eq.s32.totalorder %v479, %v519
  %vm524 = vcmp.eq.s32.totalorder %v482, %v519
  %vm525 = vcmp.eq.s32.totalorder %v485, %v519
  %vm526 = vcmp.eq.s32.totalorder %v488, %v519
  %vm527 = vcmp.eq.s32.totalorder %v491, %v519
  %vm528 = vcmp.eq.s32.totalorder %v494, %v519
  %vm529 = vcmp.eq.s32.totalorder %v497, %v519
  %vm530 = vcmp.eq.s32.totalorder %v500, %v519
  %vm531 = vcmp.eq.s32.totalorder %v503, %v519
  %vm532 = vcmp.eq.s32.totalorder %v506, %v519
  %vm533 = vcmp.eq.s32.totalorder %v509, %v519
  %vm534 = vcmp.eq.s32.totalorder %v512, %v519
  %vm535 = vcmp.eq.s32.totalorder %v515, %v519
  %vm536 = vmand %vm520, %vm435
  %vm537 = vmand %vm521, %vm436
  %vm538 = vmand %vm522, %vm437
  %vm539 = vmand %vm523, %vm438
  %vm540 = vmand %vm524, %vm439
  %vm541 = vmand %vm525, %vm440
  %vm542 = vmand %vm526, %vm441
  %vm543 = vmand %vm527, %vm442
  %vm544 = vmand %vm528, %vm443
  %vm545 = vmand %vm529, %vm444
  %vm546 = vmand %vm530, %vm445
  %vm547 = vmand %vm531, %vm446
  %vm548 = vmand %vm532, %vm447
  %vm549 = vmand %vm533, %vm448
  %vm550 = vmand %vm534, %vm449
  %vm551 = vmand %vm535, %vm450
  %v552 = vsel %vm418, 1, 0
  %vm553 = vcmp.eq.s32.totalorder %v552, 1
  %vm554 = vmand %vm536, %vm553
  %vm555 = vmand %vm537, %vm553
  %vm556 = vmand %vm538, %vm553
  %vm557 = vmand %vm539, %vm553
  %vm558 = vmand %vm540, %vm553
  %vm559 = vmand %vm541, %vm553
  %vm560 = vmand %vm542, %vm553
  %vm561 = vmand %vm543, %vm553
  %vm562 = vmand %vm544, %vm553
  %vm563 = vmand %vm545, %vm553
  %vm564 = vmand %vm546, %vm553
  %vm565 = vmand %vm547, %vm553
  %vm566 = vmand %vm548, %vm553
  %vm567 = vmand %vm549, %vm553
  %vm568 = vmand %vm550, %vm553
  %vm569 = vmand %vm551, %vm553
  %v570 = vsel %vm554, 1.0, 0.0
  %v571 = vsel %vm555, 1.0, 0.0
  %v572 = vsel %vm556, 1.0, 0.0
  %v573 = vsel %vm557, 1.0, 0.0
  %v574 = vsel %vm558, 1.0, 0.0
  %v575 = vsel %vm559, 1.0, 0.0
  %v576 = vsel %vm560, 1.0, 0.0
  %v577 = vsel %vm561, 1.0, 0.0
  %v578 = vsel %vm562, 1.0, 0.0
  %v579 = vsel %vm563, 1.0, 0.0
  %v580 = vsel %vm564, 1.0, 0.0
  %v581 = vsel %vm565, 1.0, 0.0
  %v582 = vsel %vm566, 1.0, 0.0
  %v583 = vsel %vm567, 1.0, 0.0
  %v584 = vsel %vm568, 1.0, 0.0
  %v585 = vsel %vm569, 1.0, 0.0
  %v586 = vsel %vm553, %v362, -1e+30
  %v587 = vsel %vm553, %v363, -1e+30
  %v588 = vsel %vm553, %v364, -1e+30
  %v589 = vsel %vm553, %v365, -1e+30
  %v590 = vsel %vm553, %v366, -1e+30
  %v591 = vsel %vm553, %v367, -1e+30
  %v592 = vsel %vm553, %v368, -1e+30
  %v593 = vsel %vm553, %v369, -1e+30
  %v594 = vsel %vm553, %v370, -1e+30
  %v595 = vsel %vm553, %v371, -1e+30
  %v596 = vsel %vm553, %v372, -1e+30
  %v597 = vsel %vm553, %v373, -1e+30
  %v598 = vsel %vm553, %v374, -1e+30
  %v599 = vsel %vm553, %v375, -1e+30
  %v600 = vsel %vm553, %v376, -1e+30
  %v601 = vsel %vm553, %v377, -1e+30
  %v602 = vld [vmem:[#allocation2] sm:$0xff]
  %v603 = vld [vmem:[#allocation2 + $0x8] sm:$0xff]
  %v604 = vld [vmem:[#allocation2 + $0x10] sm:$0xff]
  %v605 = vld [vmem:[#allocation2 + $0x18] sm:$0xff]
  %v606 = vld [vmem:[#allocation2 + $0x20] sm:$0xff]
  %v607 = vld [vmem:[#allocation2 + $0x28] sm:$0xff]
  %v608 = vld [vmem:[#allocation2 + $0x30] sm:$0xff]
  %v609 = vld [vmem:[#allocation2 + $0x38] sm:$0xff]
  %v610 = vld [vmem:[#allocation2 + $0x40] sm:$0xff]
  %v611 = vld [vmem:[#allocation2 + $0x48] sm:$0xff]
  %v612 = vld [vmem:[#allocation2 + $0x50] sm:$0xff]
  %v613 = vld [vmem:[#allocation2 + $0x58] sm:$0xff]
  %v614 = vld [vmem:[#allocation2 + $0x60] sm:$0xff]
  %v615 = vld [vmem:[#allocation2 + $0x68] sm:$0xff]
  %v616 = vld [vmem:[#allocation2 + $0x70] sm:$0xff]
  %v617 = vld [vmem:[#allocation2 + $0x78] sm:$0xff]
  %618 = vmax.xlane.f32.xlu0 %v586
  %v619 = vpop.xlane.xlu0 %618
  %620 = vmax.xlane.f32.xlu0 %v587
  %v621 = vpop.xlane.xlu0 %620
  %622 = vmax.xlane.f32.xlu0 %v588
  %v623 = vpop.xlane.xlu0 %622
  %624 = vmax.xlane.f32.xlu0 %v589
  %v625 = vpop.xlane.xlu0 %624
  %626 = vmax.xlane.f32.xlu0 %v590
  %v627 = vpop.xlane.xlu0 %626
  %628 = vmax.xlane.f32.xlu0 %v591
  %v629 = vpop.xlane.xlu0 %628
  %630 = vmax.xlane.f32.xlu0 %v592
  %v631 = vpop.xlane.xlu0 %630
  %632 = vmax.xlane.f32.xlu0 %v593
  %v633 = vpop.xlane.xlu0 %632
  %634 = vmax.xlane.f32.xlu0 %v594
  %v635 = vpop.xlane.xlu0 %634
  %636 = vmax.xlane.f32.xlu0 %v595
  %v637 = vpop.xlane.xlu0 %636
  %638 = vmax.xlane.f32.xlu0 %v596
  %v639 = vpop.xlane.xlu0 %638
  %640 = vmax.xlane.f32.xlu0 %v597
  %v641 = vpop.xlane.xlu0 %640
  %642 = vmax.xlane.f32.xlu0 %v598
  %v643 = vpop.xlane.xlu0 %642
  %644 = vmax.xlane.f32.xlu0 %v599
  %v645 = vpop.xlane.xlu0 %644
  %646 = vmax.xlane.f32.xlu0 %v600
  %v647 = vpop.xlane.xlu0 %646
  %648 = vmax.xlane.f32.xlu0 %v601
  %v649 = vpop.xlane.xlu0 %648
  %v650 = vmax.f32 %v602, %v619
  %v651 = vmax.f32 %v603, %v621
  %v652 = vmax.f32 %v604, %v623
  %v653 = vmax.f32 %v605, %v625
  %v654 = vmax.f32 %v606, %v627
  %v655 = vmax.f32 %v607, %v629
  %v656 = vmax.f32 %v608, %v631
  %v657 = vmax.f32 %v609, %v633
  %v658 = vmax.f32 %v610, %v635
  %v659 = vmax.f32 %v611, %v637
  %v660 = vmax.f32 %v612, %v639
  %v661 = vmax.f32 %v613, %v641
  %v662 = vmax.f32 %v614, %v643
  %v663 = vmax.f32 %v615, %v645
  %v664 = vmax.f32 %v616, %v647
  %v665 = vmax.f32 %v617, %v649
  %v666 = vsub.f32 %v602, %v650
  %v667 = vsub.f32 %v603, %v651
  %v668 = vsub.f32 %v604, %v652
  %v669 = vsub.f32 %v605, %v653
  %v670 = vsub.f32 %v606, %v654
  %v671 = vsub.f32 %v607, %v655
  %v672 = vsub.f32 %v608, %v656
  %v673 = vsub.f32 %v609, %v657
  %v674 = vsub.f32 %v610, %v658
  %v675 = vsub.f32 %v611, %v659
  %v676 = vsub.f32 %v612, %v660
  %v677 = vsub.f32 %v613, %v661
  %v678 = vsub.f32 %v614, %v662
  %v679 = vsub.f32 %v615, %v663
  %v680 = vsub.f32 %v616, %v664
  %v681 = vsub.f32 %v617, %v665
  %v682 = vmul.f32 %v666, 1.442695
  %v683 = vpow.pop %v682
  %v684 = vmul.f32 %v667, 1.442695
  %v685 = vpow.pop %v684
  %v686 = vmul.f32 %v668, 1.442695
  %v687 = vpow.pop %v686
  %v688 = vmul.f32 %v669, 1.442695
  %v689 = vpow.pop %v688
  %v690 = vmul.f32 %v670, 1.442695
  %v691 = vpow.pop %v690
  %v692 = vmul.f32 %v671, 1.442695
  %v693 = vpow.pop %v692
  %v694 = vmul.f32 %v672, 1.442695
  %v695 = vpow.pop %v694
  %v696 = vmul.f32 %v673, 1.442695
  %v697 = vpow.pop %v696
  %v698 = vmul.f32 %v674, 1.442695
  %v699 = vpow.pop %v698
  %v700 = vmul.f32 %v675, 1.442695
  %v701 = vpow.pop %v700
  %v702 = vmul.f32 %v676, 1.442695
  %v703 = vpow.pop %v702
  %v704 = vmul.f32 %v677, 1.442695
  %v705 = vpow.pop %v704
  %v706 = vmul.f32 %v678, 1.442695
  %v707 = vpow.pop %v706
  %v708 = vmul.f32 %v679, 1.442695
  %v709 = vpow.pop %v708
  %v710 = vmul.f32 %v680, 1.442695
  %v711 = vpow.pop %v710
  %v712 = vmul.f32 %v681, 1.442695
  %v713 = vpow.pop %v712
  %vm714 = vmand %vm435, %vm553
  %vm715 = vmand %vm436, %vm553
  %vm716 = vmand %vm437, %vm553
  %vm717 = vmand %vm438, %vm553
  %vm718 = vmand %vm439, %vm553
  %vm719 = vmand %vm440, %vm553
  %vm720 = vmand %vm441, %vm553
  %vm721 = vmand %vm442, %vm553
  %vm722 = vmand %vm443, %vm553
  %vm723 = vmand %vm444, %vm553
  %vm724 = vmand %vm445, %vm553
  %vm725 = vmand %vm446, %vm553
  %vm726 = vmand %vm447, %vm553
  %vm727 = vmand %vm448, %vm553
  %vm728 = vmand %vm449, %vm553
  %vm729 = vmand %vm450, %vm553
  %v730 = vsel %vm714, %v362, -1e+30
  %v731 = vsel %vm715, %v363, -1e+30
  %v732 = vsel %vm716, %v364, -1e+30
  %v733 = vsel %vm717, %v365, -1e+30
  %v734 = vsel %vm718, %v366, -1e+30
  %v735 = vsel %vm719, %v367, -1e+30
  %v736 = vsel %vm720, %v368, -1e+30
  %v737 = vsel %vm721, %v369, -1e+30
  %v738 = vsel %vm722, %v370, -1e+30
  %v739 = vsel %vm723, %v371, -1e+30
  %v740 = vsel %vm724, %v372, -1e+30
  %v741 = vsel %vm725, %v373, -1e+30
  %v742 = vsel %vm726, %v374, -1e+30
  %v743 = vsel %vm727, %v375, -1e+30
  %v744 = vsel %vm728, %v376, -1e+30
  %v745 = vsel %vm729, %v377, -1e+30
  %v746 = vld [vmem:[#allocation3] sm:$0xff]
  %v747 = vld [vmem:[#allocation3 + $0x8] sm:$0xff]
  %v748 = vld [vmem:[#allocation3 + $0x10] sm:$0xff]
  %v749 = vld [vmem:[#allocation3 + $0x18] sm:$0xff]
  %v750 = vld [vmem:[#allocation3 + $0x20] sm:$0xff]
  %v751 = vld [vmem:[#allocation3 + $0x28] sm:$0xff]
  %v752 = vld [vmem:[#allocation3 + $0x30] sm:$0xff]
  %v753 = vld [vmem:[#allocation3 + $0x38] sm:$0xff]
  %v754 = vld [vmem:[#allocation3 + $0x40] sm:$0xff]
  %v755 = vld [vmem:[#allocation3 + $0x48] sm:$0xff]
  %v756 = vld [vmem:[#allocation3 + $0x50] sm:$0xff]
  %v757 = vld [vmem:[#allocation3 + $0x58] sm:$0xff]
  %v758 = vld [vmem:[#allocation3 + $0x60] sm:$0xff]
  %v759 = vld [vmem:[#allocation3 + $0x68] sm:$0xff]
  %v760 = vld [vmem:[#allocation3 + $0x70] sm:$0xff]
  %v761 = vld [vmem:[#allocation3 + $0x78] sm:$0xff]
  %v762 = vmul.f32 %v683, %v746
  %v763 = vmul.f32 %v685, %v747
  %v764 = vmul.f32 %v687, %v748
  %v765 = vmul.f32 %v689, %v749
  %v766 = vmul.f32 %v691, %v750
  %v767 = vmul.f32 %v693, %v751
  %v768 = vmul.f32 %v695, %v752
  %v769 = vmul.f32 %v697, %v753
  %v770 = vmul.f32 %v699, %v754
  %v771 = vmul.f32 %v701, %v755
  %v772 = vmul.f32 %v703, %v756
  %v773 = vmul.f32 %v705, %v757
  %v774 = vmul.f32 %v707, %v758
  %v775 = vmul.f32 %v709, %v759
  %v776 = vmul.f32 %v711, %v760
  %v777 = vmul.f32 %v713, %v761
  %779 = vset.pattern.permute.xlu0 0
  %780 = vperm.xlu0 %779, %v650
  %v781 = vpop.permute.xlu0 %780
  %784 = vset.pattern.permute.xlu0 0
  %785 = vperm.xlu0 %784, %v651
  %v786 = vpop.permute.xlu0 %785
  %789 = vset.pattern.permute.xlu0 0
  %790 = vperm.xlu0 %789, %v652
  %v791 = vpop.permute.xlu0 %790
  %794 = vset.pattern.permute.xlu0 0
  %795 = vperm.xlu0 %794, %v653
  %v796 = vpop.permute.xlu0 %795
  %799 = vset.pattern.permute.xlu0 0
  %800 = vperm.xlu0 %799, %v654
  %v801 = vpop.permute.xlu0 %800
  %804 = vset.pattern.permute.xlu0 0
  %805 = vperm.xlu0 %804, %v655
  %v806 = vpop.permute.xlu0 %805
  %809 = vset.pattern.permute.xlu0 0
  %810 = vperm.xlu0 %809, %v656
  %v811 = vpop.permute.xlu0 %810
  %814 = vset.pattern.permute.xlu0 0
  %815 = vperm.xlu0 %814, %v657
  %v816 = vpop.permute.xlu0 %815
  %819 = vset.pattern.permute.xlu0 0
  %820 = vperm.xlu0 %819, %v658
  %v821 = vpop.permute.xlu0 %820
  %824 = vset.pattern.permute.xlu0 0
  %825 = vperm.xlu0 %824, %v659
  %v826 = vpop.permute.xlu0 %825
  %829 = vset.pattern.permute.xlu0 0
  %830 = vperm.xlu0 %829, %v660
  %v831 = vpop.permute.xlu0 %830
  %834 = vset.pattern.permute.xlu0 0
  %835 = vperm.xlu0 %834, %v661
  %v836 = vpop.permute.xlu0 %835
  %839 = vset.pattern.permute.xlu0 0
  %840 = vperm.xlu0 %839, %v662
  %v841 = vpop.permute.xlu0 %840
  %844 = vset.pattern.permute.xlu0 0
  %845 = vperm.xlu0 %844, %v663
  %v846 = vpop.permute.xlu0 %845
  %849 = vset.pattern.permute.xlu0 0
  %850 = vperm.xlu0 %849, %v664
  %v851 = vpop.permute.xlu0 %850
  %854 = vset.pattern.permute.xlu0 0
  %855 = vperm.xlu0 %854, %v665
  %v856 = vpop.permute.xlu0 %855
  %v858 = vsub.f32 %v730, %v781
  %v859 = vsub.f32 %v731, %v786
  %v860 = vsub.f32 %v732, %v791
  %v861 = vsub.f32 %v733, %v796
  %v862 = vsub.f32 %v734, %v801
  %v863 = vsub.f32 %v735, %v806
  %v864 = vsub.f32 %v736, %v811
  %v865 = vsub.f32 %v737, %v816
  %v866 = vsub.f32 %v738, %v821
  %v867 = vsub.f32 %v739, %v826
  %v868 = vsub.f32 %v740, %v831
  %v869 = vsub.f32 %v741, %v836
  %v870 = vsub.f32 %v742, %v841
  %v871 = vsub.f32 %v743, %v846
  %v872 = vsub.f32 %v744, %v851
  %v873 = vsub.f32 %v745, %v856
  %v874 = vmul.f32 %v858, 1.442695
  %v875 = vpow.pop %v874
  %v876 = vmul.f32 %v859, 1.442695
  %v877 = vpow.pop %v876
  %v878 = vmul.f32 %v860, 1.442695
  %v879 = vpow.pop %v878
  %v880 = vmul.f32 %v861, 1.442695
  %v881 = vpow.pop %v880
  %v882 = vmul.f32 %v862, 1.442695
  %v883 = vpow.pop %v882
  %v884 = vmul.f32 %v863, 1.442695
  %v885 = vpow.pop %v884
  %v886 = vmul.f32 %v864, 1.442695
  %v887 = vpow.pop %v886
  %v888 = vmul.f32 %v865, 1.442695
  %v889 = vpow.pop %v888
  %v890 = vmul.f32 %v866, 1.442695
  %v891 = vpow.pop %v890
  %v892 = vmul.f32 %v867, 1.442695
  %v893 = vpow.pop %v892
  %v894 = vmul.f32 %v868, 1.442695
  %v895 = vpow.pop %v894
  %v896 = vmul.f32 %v869, 1.442695
  %v897 = vpow.pop %v896
  %v898 = vmul.f32 %v870, 1.442695
  %v899 = vpow.pop %v898
  %v900 = vmul.f32 %v871, 1.442695
  %v901 = vpow.pop %v900
  %v902 = vmul.f32 %v872, 1.442695
  %v903 = vpow.pop %v902
  %v904 = vmul.f32 %v873, 1.442695
  %v905 = vpow.pop %v904
  %906 = vadd.xlane.f32.xlu0 %v875
  %v907 = vpop.xlane.xlu0 %906
  %908 = vadd.xlane.f32.xlu0 %v877
  %v909 = vpop.xlane.xlu0 %908
  %910 = vadd.xlane.f32.xlu0 %v879
  %v911 = vpop.xlane.xlu0 %910
  %912 = vadd.xlane.f32.xlu0 %v881
  %v913 = vpop.xlane.xlu0 %912
  %914 = vadd.xlane.f32.xlu0 %v883
  %v915 = vpop.xlane.xlu0 %914
  %916 = vadd.xlane.f32.xlu0 %v885
  %v917 = vpop.xlane.xlu0 %916
  %918 = vadd.xlane.f32.xlu0 %v887
  %v919 = vpop.xlane.xlu0 %918
  %920 = vadd.xlane.f32.xlu0 %v889
  %v921 = vpop.xlane.xlu0 %920
  %922 = vadd.xlane.f32.xlu0 %v891
  %v923 = vpop.xlane.xlu0 %922
  %924 = vadd.xlane.f32.xlu0 %v893
  %v925 = vpop.xlane.xlu0 %924
  %926 = vadd.xlane.f32.xlu0 %v895
  %v927 = vpop.xlane.xlu0 %926
  %928 = vadd.xlane.f32.xlu0 %v897
  %v929 = vpop.xlane.xlu0 %928
  %930 = vadd.xlane.f32.xlu0 %v899
  %v931 = vpop.xlane.xlu0 %930
  %932 = vadd.xlane.f32.xlu0 %v901
  %v933 = vpop.xlane.xlu0 %932
  %934 = vadd.xlane.f32.xlu0 %v903
  %v935 = vpop.xlane.xlu0 %934
  %936 = vadd.xlane.f32.xlu0 %v905
  %v937 = vpop.xlane.xlu0 %936
  %v938 = vadd.f32 %v762, %v907
  %v939 = vadd.f32 %v763, %v909
  %v940 = vadd.f32 %v764, %v911
  %v941 = vadd.f32 %v765, %v913
  %v942 = vadd.f32 %v766, %v915
  %v943 = vadd.f32 %v767, %v917
  %v944 = vadd.f32 %v768, %v919
  %v945 = vadd.f32 %v769, %v921
  %v946 = vadd.f32 %v770, %v923
  %v947 = vadd.f32 %v771, %v925
  %v948 = vadd.f32 %v772, %v927
  %v949 = vadd.f32 %v773, %v929
  %v950 = vadd.f32 %v774, %v931
  %v951 = vadd.f32 %v775, %v933
  %v952 = vadd.f32 %v776, %v935
  %v953 = vadd.f32 %v777, %v937
  %vm954 = vcmask 7168
  %955 = vst.msk [vmem:[#allocation3] sm:$0xff] %vm954, %v938
  %956 = vst.msk [vmem:[#allocation3 + $0x8] sm:$0xff] %vm954, %v939
  %957 = vst.msk [vmem:[#allocation3 + $0x10] sm:$0xff] %vm954, %v940
  %958 = vst.msk [vmem:[#allocation3 + $0x18] sm:$0xff] %vm954, %v941
  %959 = vst.msk [vmem:[#allocation3 + $0x20] sm:$0xff] %vm954, %v942
  %960 = vst.msk [vmem:[#allocation3 + $0x28] sm:$0xff] %vm954, %v943
  %961 = vst.msk [vmem:[#allocation3 + $0x30] sm:$0xff] %vm954, %v944
  %962 = vst.msk [vmem:[#allocation3 + $0x38] sm:$0xff] %vm954, %v945
  %963 = vst.msk [vmem:[#allocation3 + $0x40] sm:$0xff] %vm954, %v946
  %964 = vst.msk [vmem:[#allocation3 + $0x48] sm:$0xff] %vm954, %v947
  %965 = vst.msk [vmem:[#allocation3 + $0x50] sm:$0xff] %vm954, %v948
  %966 = vst.msk [vmem:[#allocation3 + $0x58] sm:$0xff] %vm954, %v949
  %967 = vst.msk [vmem:[#allocation3 + $0x60] sm:$0xff] %vm954, %v950
  %968 = vst.msk [vmem:[#allocation3 + $0x68] sm:$0xff] %vm954, %v951
  %969 = vst.msk [vmem:[#allocation3 + $0x70] sm:$0xff] %vm954, %v952
  %970 = vst.msk [vmem:[#allocation3 + $0x78] sm:$0xff] %vm954, %v953
  %v971 = vld [vmem:[#allocation4] sm:$0xff]
  %v972 = vld [vmem:[#allocation4 + $0x8] sm:$0xff]
  %v973 = vld [vmem:[#allocation4 + $0x10] sm:$0xff]
  %v974 = vld [vmem:[#allocation4 + $0x18] sm:$0xff]
  %v975 = vld [vmem:[#allocation4 + $0x20] sm:$0xff]
  %v976 = vld [vmem:[#allocation4 + $0x28] sm:$0xff]
  %v977 = vld [vmem:[#allocation4 + $0x30] sm:$0xff]
  %v978 = vld [vmem:[#allocation4 + $0x38] sm:$0xff]
  %v979 = vld [vmem:[#allocation4 + $0x40] sm:$0xff]
  %v980 = vld [vmem:[#allocation4 + $0x48] sm:$0xff]
  %v981 = vld [vmem:[#allocation4 + $0x50] sm:$0xff]
  %v982 = vld [vmem:[#allocation4 + $0x58] sm:$0xff]
  %v983 = vld [vmem:[#allocation4 + $0x60] sm:$0xff]
  %v984 = vld [vmem:[#allocation4 + $0x68] sm:$0xff]
  %v985 = vld [vmem:[#allocation4 + $0x70] sm:$0xff]
  %v986 = vld [vmem:[#allocation4 + $0x78] sm:$0xff]
  %v987 = vmul.f32 %v570, %v362
  %v988 = vmul.f32 %v571, %v363
  %v989 = vmul.f32 %v572, %v364
  %v990 = vmul.f32 %v573, %v365
  %v991 = vmul.f32 %v574, %v366
  %v992 = vmul.f32 %v575, %v367
  %v993 = vmul.f32 %v576, %v368
  %v994 = vmul.f32 %v577, %v369
  %v995 = vmul.f32 %v578, %v370
  %v996 = vmul.f32 %v579, %v371
  %v997 = vmul.f32 %v580, %v372
  %v998 = vmul.f32 %v581, %v373
  %v999 = vmul.f32 %v582, %v374
  %v1000 = vmul.f32 %v583, %v375
  %v1001 = vmul.f32 %v584, %v376
  %v1002 = vmul.f32 %v585, %v377
  %1003 = vadd.xlane.f32.xlu0 %v987
  %v1004 = vpop.xlane.xlu0 %1003
  %1005 = vadd.xlane.f32.xlu0 %v988
  %v1006 = vpop.xlane.xlu0 %1005
  %1007 = vadd.xlane.f32.xlu0 %v989
  %v1008 = vpop.xlane.xlu0 %1007
  %1009 = vadd.xlane.f32.xlu0 %v990
  %v1010 = vpop.xlane.xlu0 %1009
  %1011 = vadd.xlane.f32.xlu0 %v991
  %v1012 = vpop.xlane.xlu0 %1011
  %1013 = vadd.xlane.f32.xlu0 %v992
  %v1014 = vpop.xlane.xlu0 %1013
  %1015 = vadd.xlane.f32.xlu0 %v993
  %v1016 = vpop.xlane.xlu0 %1015
  %1017 = vadd.xlane.f32.xlu0 %v994
  %v1018 = vpop.xlane.xlu0 %1017
  %1019 = vadd.xlane.f32.xlu0 %v995
  %v1020 = vpop.xlane.xlu0 %1019
  %1021 = vadd.xlane.f32.xlu0 %v996
  %v1022 = vpop.xlane.xlu0 %1021
  %1023 = vadd.xlane.f32.xlu0 %v997
  %v1024 = vpop.xlane.xlu0 %1023
  %1025 = vadd.xlane.f32.xlu0 %v998
  %v1026 = vpop.xlane.xlu0 %1025
  %1027 = vadd.xlane.f32.xlu0 %v999
  %v1028 = vpop.xlane.xlu0 %1027
  %1029 = vadd.xlane.f32.xlu0 %v1000
  %v1030 = vpop.xlane.xlu0 %1029
  %1031 = vadd.xlane.f32.xlu0 %v1001
  %v1032 = vpop.xlane.xlu0 %1031
  %1033 = vadd.xlane.f32.xlu0 %v1002
  %v1034 = vpop.xlane.xlu0 %1033
  %v1035 = vadd.f32 %v971, %v1004
  %v1036 = vadd.f32 %v972, %v1006
  %v1037 = vadd.f32 %v973, %v1008
  %v1038 = vadd.f32 %v974, %v1010
  %v1039 = vadd.f32 %v975, %v1012
  %v1040 = vadd.f32 %v976, %v1014
  %v1041 = vadd.f32 %v977, %v1016
  %v1042 = vadd.f32 %v978, %v1018
  %v1043 = vadd.f32 %v979, %v1020
  %v1044 = vadd.f32 %v980, %v1022
  %v1045 = vadd.f32 %v981, %v1024
  %v1046 = vadd.f32 %v982, %v1026
  %v1047 = vadd.f32 %v983, %v1028
  %v1048 = vadd.f32 %v984, %v1030
  %v1049 = vadd.f32 %v985, %v1032
  %v1050 = vadd.f32 %v986, %v1034
  %1051 = vst.msk [vmem:[#allocation4] sm:$0xff] %vm954, %v1035
  %1052 = vst.msk [vmem:[#allocation4 + $0x8] sm:$0xff] %vm954, %v1036
  %1053 = vst.msk [vmem:[#allocation4 + $0x10] sm:$0xff] %vm954, %v1037
  %1054 = vst.msk [vmem:[#allocation4 + $0x18] sm:$0xff] %vm954, %v1038
  %1055 = vst.msk [vmem:[#allocation4 + $0x20] sm:$0xff] %vm954, %v1039
  %1056 = vst.msk [vmem:[#allocation4 + $0x28] sm:$0xff] %vm954, %v1040
  %1057 = vst.msk [vmem:[#allocation4 + $0x30] sm:$0xff] %vm954, %v1041
  %1058 = vst.msk [vmem:[#allocation4 + $0x38] sm:$0xff] %vm954, %v1042
  %1059 = vst.msk [vmem:[#allocation4 + $0x40] sm:$0xff] %vm954, %v1043
  %1060 = vst.msk [vmem:[#allocation4 + $0x48] sm:$0xff] %vm954, %v1044
  %1061 = vst.msk [vmem:[#allocation4 + $0x50] sm:$0xff] %vm954, %v1045
  %1062 = vst.msk [vmem:[#allocation4 + $0x58] sm:$0xff] %vm954, %v1046
  %1063 = vst.msk [vmem:[#allocation4 + $0x60] sm:$0xff] %vm954, %v1047
  %1064 = vst.msk [vmem:[#allocation4 + $0x68] sm:$0xff] %vm954, %v1048
  %1065 = vst.msk [vmem:[#allocation4 + $0x70] sm:$0xff] %vm954, %v1049
  %1066 = vst.msk [vmem:[#allocation4 + $0x78] sm:$0xff] %vm954, %v1050
  %v1067 = vld [vmem:[#allocation5] sm:$0xff]
  %v1068 = vld [vmem:[#allocation5 + $0x8] sm:$0xff]
  %v1069 = vld [vmem:[#allocation5 + $0x10] sm:$0xff]
  %v1070 = vld [vmem:[#allocation5 + $0x18] sm:$0xff]
  %v1071 = vld [vmem:[#allocation5 + $0x20] sm:$0xff]
  %v1072 = vld [vmem:[#allocation5 + $0x28] sm:$0xff]
  %v1073 = vld [vmem:[#allocation5 + $0x30] sm:$0xff]
  %v1074 = vld [vmem:[#allocation5 + $0x38] sm:$0xff]
  %v1075 = vld [vmem:[#allocation5 + $0x40] sm:$0xff]
  %v1076 = vld [vmem:[#allocation5 + $0x48] sm:$0xff]
  %v1077 = vld [vmem:[#allocation5 + $0x50] sm:$0xff]
  %v1078 = vld [vmem:[#allocation5 + $0x58] sm:$0xff]
  %v1079 = vld [vmem:[#allocation5 + $0x60] sm:$0xff]
  %v1080 = vld [vmem:[#allocation5 + $0x68] sm:$0xff]
  %v1081 = vld [vmem:[#allocation5 + $0x70] sm:$0xff]
  %v1082 = vld [vmem:[#allocation5 + $0x78] sm:$0xff]
  %1083 = vadd.xlane.f32.xlu0 %v570
  %v1084 = vpop.xlane.xlu0 %1083
  %1085 = vadd.xlane.f32.xlu0 %v571
  %v1086 = vpop.xlane.xlu0 %1085
  %1087 = vadd.xlane.f32.xlu0 %v572
  %v1088 = vpop.xlane.xlu0 %1087
  %1089 = vadd.xlane.f32.xlu0 %v573
  %v1090 = vpop.xlane.xlu0 %1089
  %1091 = vadd.xlane.f32.xlu0 %v574
  %v1092 = vpop.xlane.xlu0 %1091
  %1093 = vadd.xlane.f32.xlu0 %v575
  %v1094 = vpop.xlane.xlu0 %1093
  %1095 = vadd.xlane.f32.xlu0 %v576
  %v1096 = vpop.xlane.xlu0 %1095
  %1097 = vadd.xlane.f32.xlu0 %v577
  %v1098 = vpop.xlane.xlu0 %1097
  %1099 = vadd.xlane.f32.xlu0 %v578
  %v1100 = vpop.xlane.xlu0 %1099
  %1101 = vadd.xlane.f32.xlu0 %v579
  %v1102 = vpop.xlane.xlu0 %1101
  %1103 = vadd.xlane.f32.xlu0 %v580
  %v1104 = vpop.xlane.xlu0 %1103
  %1105 = vadd.xlane.f32.xlu0 %v581
  %v1106 = vpop.xlane.xlu0 %1105
  %1107 = vadd.xlane.f32.xlu0 %v582
  %v1108 = vpop.xlane.xlu0 %1107
  %1109 = vadd.xlane.f32.xlu0 %v583
  %v1110 = vpop.xlane.xlu0 %1109
  %1111 = vadd.xlane.f32.xlu0 %v584
  %v1112 = vpop.xlane.xlu0 %1111
  %1113 = vadd.xlane.f32.xlu0 %v585
  %v1114 = vpop.xlane.xlu0 %1113
  %v1115 = vadd.f32 %v1067, %v1084
  %v1116 = vadd.f32 %v1068, %v1086
  %v1117 = vadd.f32 %v1069, %v1088
  %v1118 = vadd.f32 %v1070, %v1090
  %v1119 = vadd.f32 %v1071, %v1092
  %v1120 = vadd.f32 %v1072, %v1094
  %v1121 = vadd.f32 %v1073, %v1096
  %v1122 = vadd.f32 %v1074, %v1098
  %v1123 = vadd.f32 %v1075, %v1100
  %v1124 = vadd.f32 %v1076, %v1102
  %v1125 = vadd.f32 %v1077, %v1104
  %v1126 = vadd.f32 %v1078, %v1106
  %v1127 = vadd.f32 %v1079, %v1108
  %v1128 = vadd.f32 %v1080, %v1110
  %v1129 = vadd.f32 %v1081, %v1112
  %v1130 = vadd.f32 %v1082, %v1114
  %1131 = vst.msk [vmem:[#allocation5] sm:$0xff] %vm954, %v1115
  %1132 = vst.msk [vmem:[#allocation5 + $0x8] sm:$0xff] %vm954, %v1116
  %1133 = vst.msk [vmem:[#allocation5 + $0x10] sm:$0xff] %vm954, %v1117
  %1134 = vst.msk [vmem:[#allocation5 + $0x18] sm:$0xff] %vm954, %v1118
  %1135 = vst.msk [vmem:[#allocation5 + $0x20] sm:$0xff] %vm954, %v1119
  %1136 = vst.msk [vmem:[#allocation5 + $0x28] sm:$0xff] %vm954, %v1120
  %1137 = vst.msk [vmem:[#allocation5 + $0x30] sm:$0xff] %vm954, %v1121
  %1138 = vst.msk [vmem:[#allocation5 + $0x38] sm:$0xff] %vm954, %v1122
  %1139 = vst.msk [vmem:[#allocation5 + $0x40] sm:$0xff] %vm954, %v1123
  %1140 = vst.msk [vmem:[#allocation5 + $0x48] sm:$0xff] %vm954, %v1124
  %1141 = vst.msk [vmem:[#allocation5 + $0x50] sm:$0xff] %vm954, %v1125
  %1142 = vst.msk [vmem:[#allocation5 + $0x58] sm:$0xff] %vm954, %v1126
  %1143 = vst.msk [vmem:[#allocation5 + $0x60] sm:$0xff] %vm954, %v1127
  %1144 = vst.msk [vmem:[#allocation5 + $0x68] sm:$0xff] %vm954, %v1128
  %1145 = vst.msk [vmem:[#allocation5 + $0x70] sm:$0xff] %vm954, %v1129
  %1146 = vst.msk [vmem:[#allocation5 + $0x78] sm:$0xff] %vm954, %v1130
  %1147 = vst.msk [vmem:[#allocation2] sm:$0xff] %vm954, %v650
  %1148 = vst.msk [vmem:[#allocation2 + $0x8] sm:$0xff] %vm954, %v651
  %1149 = vst.msk [vmem:[#allocation2 + $0x10] sm:$0xff] %vm954, %v652
  %1150 = vst.msk [vmem:[#allocation2 + $0x18] sm:$0xff] %vm954, %v653
  %1151 = vst.msk [vmem:[#allocation2 + $0x20] sm:$0xff] %vm954, %v654
  %1152 = vst.msk [vmem:[#allocation2 + $0x28] sm:$0xff] %vm954, %v655
  %1153 = vst.msk [vmem:[#allocation2 + $0x30] sm:$0xff] %vm954, %v656
  %1154 = vst.msk [vmem:[#allocation2 + $0x38] sm:$0xff] %vm954, %v657
  %1155 = vst.msk [vmem:[#allocation2 + $0x40] sm:$0xff] %vm954, %v658
  %1156 = vst.msk [vmem:[#allocation2 + $0x48] sm:$0xff] %vm954, %v659
  %1157 = vst.msk [vmem:[#allocation2 + $0x50] sm:$0xff] %vm954, %v660
  %1158 = vst.msk [vmem:[#allocation2 + $0x58] sm:$0xff] %vm954, %v661
  %1159 = vst.msk [vmem:[#allocation2 + $0x60] sm:$0xff] %vm954, %v662
  %1160 = vst.msk [vmem:[#allocation2 + $0x68] sm:$0xff] %vm954, %v663
  %1161 = vst.msk [vmem:[#allocation2 + $0x70] sm:$0xff] %vm954, %v664
  %1162 = vst.msk [vmem:[#allocation2 + $0x78] sm:$0xff] %vm954, %v665
  // Predicated region
  $region22: #{tpu_custom_call.1} parent=0 // pred_check
    %p1163 = pneg %p19
  $region23: #{tpu_custom_call.1} parent=0 // pred_check_branch
    %1165 = sbr.rel (%p1163) target = $region25
  $region24: #{tpu_custom_call.1} parent=0 // pred_region
    %v1166 = vld [vmem:[#allocation5] sm:$0xff]
    %v1167 = vld [vmem:[#allocation5 + $0x8] sm:$0xff]
    %v1168 = vld [vmem:[#allocation5 + $0x10] sm:$0xff]
    %v1169 = vld [vmem:[#allocation5 + $0x18] sm:$0xff]
    %v1170 = vld [vmem:[#allocation5 + $0x20] sm:$0xff]
    %v1171 = vld [vmem:[#allocation5 + $0x28] sm:$0xff]
    %v1172 = vld [vmem:[#allocation5 + $0x30] sm:$0xff]
    %v1173 = vld [vmem:[#allocation5 + $0x38] sm:$0xff]
    %v1174 = vld [vmem:[#allocation5 + $0x40] sm:$0xff]
    %v1175 = vld [vmem:[#allocation5 + $0x48] sm:$0xff]
    %v1176 = vld [vmem:[#allocation5 + $0x50] sm:$0xff]
    %v1177 = vld [vmem:[#allocation5 + $0x58] sm:$0xff]
    %v1178 = vld [vmem:[#allocation5 + $0x60] sm:$0xff]
    %v1179 = vld [vmem:[#allocation5 + $0x68] sm:$0xff]
    %v1180 = vld [vmem:[#allocation5 + $0x70] sm:$0xff]
    %v1181 = vld [vmem:[#allocation5 + $0x78] sm:$0xff]
    %vm1182 = vcmp.eq.f32.partialorder %v1166, 0.0
    %vm1183 = vcmp.eq.f32.partialorder %v1167, 0.0
    %vm1184 = vcmp.eq.f32.partialorder %v1168, 0.0
    %vm1185 = vcmp.eq.f32.partialorder %v1169, 0.0
    %vm1186 = vcmp.eq.f32.partialorder %v1170, 0.0
    %vm1187 = vcmp.eq.f32.partialorder %v1171, 0.0
    %vm1188 = vcmp.eq.f32.partialorder %v1172, 0.0
    %vm1189 = vcmp.eq.f32.partialorder %v1173, 0.0
    %vm1190 = vcmp.eq.f32.partialorder %v1174, 0.0
    %vm1191 = vcmp.eq.f32.partialorder %v1175, 0.0
    %vm1192 = vcmp.eq.f32.partialorder %v1176, 0.0
    %vm1193 = vcmp.eq.f32.partialorder %v1177, 0.0
    %vm1194 = vcmp.eq.f32.partialorder %v1178, 0.0
    %vm1195 = vcmp.eq.f32.partialorder %v1179, 0.0
    %vm1196 = vcmp.eq.f32.partialorder %v1180, 0.0
    %vm1197 = vcmp.eq.f32.partialorder %v1181, 0.0
    %v1198 = vsel %vm1182, 1.0, 0.0
    %v1199 = vsel %vm1183, 1.0, 0.0
    %v1200 = vsel %vm1184, 1.0, 0.0
    %v1201 = vsel %vm1185, 1.0, 0.0
    %v1202 = vsel %vm1186, 1.0, 0.0
    %v1203 = vsel %vm1187, 1.0, 0.0
    %v1204 = vsel %vm1188, 1.0, 0.0
    %v1205 = vsel %vm1189, 1.0, 0.0
    %v1206 = vsel %vm1190, 1.0, 0.0
    %v1207 = vsel %vm1191, 1.0, 0.0
    %v1208 = vsel %vm1192, 1.0, 0.0
    %v1209 = vsel %vm1193, 1.0, 0.0
    %v1210 = vsel %vm1194, 1.0, 0.0
    %v1211 = vsel %vm1195, 1.0, 0.0
    %v1212 = vsel %vm1196, 1.0, 0.0
    %v1213 = vsel %vm1197, 1.0, 0.0
    %v1214 = vld [vmem:[#allocation2] sm:$0xff]
    %v1215 = vld [vmem:[#allocation2 + $0x8] sm:$0xff]
    %v1216 = vld [vmem:[#allocation2 + $0x10] sm:$0xff]
    %v1217 = vld [vmem:[#allocation2 + $0x18] sm:$0xff]
    %v1218 = vld [vmem:[#allocation2 + $0x20] sm:$0xff]
    %v1219 = vld [vmem:[#allocation2 + $0x28] sm:$0xff]
    %v1220 = vld [vmem:[#allocation2 + $0x30] sm:$0xff]
    %v1221 = vld [vmem:[#allocation2 + $0x38] sm:$0xff]
    %v1222 = vld [vmem:[#allocation2 + $0x40] sm:$0xff]
    %v1223 = vld [vmem:[#allocation2 + $0x48] sm:$0xff]
    %v1224 = vld [vmem:[#allocation2 + $0x50] sm:$0xff]
    %v1225 = vld [vmem:[#allocation2 + $0x58] sm:$0xff]
    %v1226 = vld [vmem:[#allocation2 + $0x60] sm:$0xff]
    %v1227 = vld [vmem:[#allocation2 + $0x68] sm:$0xff]
    %v1228 = vld [vmem:[#allocation2 + $0x70] sm:$0xff]
    %v1229 = vld [vmem:[#allocation2 + $0x78] sm:$0xff]
    %v1230 = vld [vmem:[#allocation3] sm:$0xff]
    %v1231 = vld [vmem:[#allocation3 + $0x8] sm:$0xff]
    %v1232 = vld [vmem:[#allocation3 + $0x10] sm:$0xff]
    %v1233 = vld [vmem:[#allocation3 + $0x18] sm:$0xff]
    %v1234 = vld [vmem:[#allocation3 + $0x20] sm:$0xff]
    %v1235 = vld [vmem:[#allocation3 + $0x28] sm:$0xff]
    %v1236 = vld [vmem:[#allocation3 + $0x30] sm:$0xff]
    %v1237 = vld [vmem:[#allocation3 + $0x38] sm:$0xff]
    %v1238 = vld [vmem:[#allocation3 + $0x40] sm:$0xff]
    %v1239 = vld [vmem:[#allocation3 + $0x48] sm:$0xff]
    %v1240 = vld [vmem:[#allocation3 + $0x50] sm:$0xff]
    %v1241 = vld [vmem:[#allocation3 + $0x58] sm:$0xff]
    %v1242 = vld [vmem:[#allocation3 + $0x60] sm:$0xff]
    %v1243 = vld [vmem:[#allocation3 + $0x68] sm:$0xff]
    %v1244 = vld [vmem:[#allocation3 + $0x70] sm:$0xff]
    %v1245 = vld [vmem:[#allocation3 + $0x78] sm:$0xff]
    %v1246 = vlog2.pop %v1230
    %v1247 = vmul.f32 %v1246, 0.6931472
    %v1248 = vlog2.pop %v1231
    %v1249 = vmul.f32 %v1248, 0.6931472
    %v1250 = vlog2.pop %v1232
    %v1251 = vmul.f32 %v1250, 0.6931472
    %v1252 = vlog2.pop %v1233
    %v1253 = vmul.f32 %v1252, 0.6931472
    %v1254 = vlog2.pop %v1234
    %v1255 = vmul.f32 %v1254, 0.6931472
    %v1256 = vlog2.pop %v1235
    %v1257 = vmul.f32 %v1256, 0.6931472
    %v1258 = vlog2.pop %v1236
    %v1259 = vmul.f32 %v1258, 0.6931472
    %v1260 = vlog2.pop %v1237
    %v1261 = vmul.f32 %v1260, 0.6931472
    %v1262 = vlog2.pop %v1238
    %v1263 = vmul.f32 %v1262, 0.6931472
    %v1264 = vlog2.pop %v1239
    %v1265 = vmul.f32 %v1264, 0.6931472
    %v1266 = vlog2.pop %v1240
    %v1267 = vmul.f32 %v1266, 0.6931472
    %v1268 = vlog2.pop %v1241
    %v1269 = vmul.f32 %v1268, 0.6931472
    %v1270 = vlog2.pop %v1242
    %v1271 = vmul.f32 %v1270, 0.6931472
    %v1272 = vlog2.pop %v1243
    %v1273 = vmul.f32 %v1272, 0.6931472
    %v1274 = vlog2.pop %v1244
    %v1275 = vmul.f32 %v1274, 0.6931472
    %v1276 = vlog2.pop %v1245
    %v1277 = vmul.f32 %v1276, 0.6931472
    %v1278 = vadd.f32 %v1214, %v1247
    %v1279 = vadd.f32 %v1215, %v1249
    %v1280 = vadd.f32 %v1216, %v1251
    %v1281 = vadd.f32 %v1217, %v1253
    %v1282 = vadd.f32 %v1218, %v1255
    %v1283 = vadd.f32 %v1219, %v1257
    %v1284 = vadd.f32 %v1220, %v1259
    %v1285 = vadd.f32 %v1221, %v1261
    %v1286 = vadd.f32 %v1222, %v1263
    %v1287 = vadd.f32 %v1223, %v1265
    %v1288 = vadd.f32 %v1224, %v1267
    %v1289 = vadd.f32 %v1225, %v1269
    %v1290 = vadd.f32 %v1226, %v1271
    %v1291 = vadd.f32 %v1227, %v1273
    %v1292 = vadd.f32 %v1228, %v1275
    %v1293 = vadd.f32 %v1229, %v1277
    %v1294 = vld [vmem:[#allocation4] sm:$0xff]
    %v1295 = vld [vmem:[#allocation4 + $0x8] sm:$0xff]
    %v1296 = vld [vmem:[#allocation4 + $0x10] sm:$0xff]
    %v1297 = vld [vmem:[#allocation4 + $0x18] sm:$0xff]
    %v1298 = vld [vmem:[#allocation4 + $0x20] sm:$0xff]
    %v1299 = vld [vmem:[#allocation4 + $0x28] sm:$0xff]
    %v1300 = vld [vmem:[#allocation4 + $0x30] sm:$0xff]
    %v1301 = vld [vmem:[#allocation4 + $0x38] sm:$0xff]
    %v1302 = vld [vmem:[#allocation4 + $0x40] sm:$0xff]
    %v1303 = vld [vmem:[#allocation4 + $0x48] sm:$0xff]
    %v1304 = vld [vmem:[#allocation4 + $0x50] sm:$0xff]
    %v1305 = vld [vmem:[#allocation4 + $0x58] sm:$0xff]
    %v1306 = vld [vmem:[#allocation4 + $0x60] sm:$0xff]
    %v1307 = vld [vmem:[#allocation4 + $0x68] sm:$0xff]
    %v1308 = vld [vmem:[#allocation4 + $0x70] sm:$0xff]
    %v1309 = vld [vmem:[#allocation4 + $0x78] sm:$0xff]
    %v1310 = vmul.f32 %v1166, %v1278
    %v1311 = vmul.f32 %v1167, %v1279
    %v1312 = vmul.f32 %v1168, %v1280
    %v1313 = vmul.f32 %v1169, %v1281
    %v1314 = vmul.f32 %v1170, %v1282
    %v1315 = vmul.f32 %v1171, %v1283
    %v1316 = vmul.f32 %v1172, %v1284
    %v1317 = vmul.f32 %v1173, %v1285
    %v1318 = vmul.f32 %v1174, %v1286
    %v1319 = vmul.f32 %v1175, %v1287
    %v1320 = vmul.f32 %v1176, %v1288
    %v1321 = vmul.f32 %v1177, %v1289
    %v1322 = vmul.f32 %v1178, %v1290
    %v1323 = vmul.f32 %v1179, %v1291
    %v1324 = vmul.f32 %v1180, %v1292
    %v1325 = vmul.f32 %v1181, %v1293
    %v1326 = vsub.f32 %v1294, %v1310
    %v1327 = vsub.f32 %v1295, %v1311
    %v1328 = vsub.f32 %v1296, %v1312
    %v1329 = vsub.f32 %v1297, %v1313
    %v1330 = vsub.f32 %v1298, %v1314
    %v1331 = vsub.f32 %v1299, %v1315
    %v1332 = vsub.f32 %v1300, %v1316
    %v1333 = vsub.f32 %v1301, %v1317
    %v1334 = vsub.f32 %v1302, %v1318
    %v1335 = vsub.f32 %v1303, %v1319
    %v1336 = vsub.f32 %v1304, %v1320
    %v1337 = vsub.f32 %v1305, %v1321
    %v1338 = vsub.f32 %v1306, %v1322
    %v1339 = vsub.f32 %v1307, %v1323
    %v1340 = vsub.f32 %v1308, %v1324
    %v1341 = vsub.f32 %v1309, %v1325
    %v1342 = vadd.f32 %v1166, %v1198
    %v1343 = vadd.f32 %v1167, %v1199
    %v1344 = vadd.f32 %v1168, %v1200
    %v1345 = vadd.f32 %v1169, %v1201
    %v1346 = vadd.f32 %v1170, %v1202
    %v1347 = vadd.f32 %v1171, %v1203
    %v1348 = vadd.f32 %v1172, %v1204
    %v1349 = vadd.f32 %v1173, %v1205
    %v1350 = vadd.f32 %v1174, %v1206
    %v1351 = vadd.f32 %v1175, %v1207
    %v1352 = vadd.f32 %v1176, %v1208
    %v1353 = vadd.f32 %v1177, %v1209
    %v1354 = vadd.f32 %v1178, %v1210
    %v1355 = vadd.f32 %v1179, %v1211
    %v1356 = vadd.f32 %v1180, %v1212
    %v1357 = vadd.f32 %v1181, %v1213
    %v1358 = vrcp.pop %v1342
    %v1359 = vmul.f32 %v1326, %v1358
    %v1360 = vrcp.pop %v1343
    %v1361 = vmul.f32 %v1327, %v1360
    %v1362 = vrcp.pop %v1344
    %v1363 = vmul.f32 %v1328, %v1362
    %v1364 = vrcp.pop %v1345
    %v1365 = vmul.f32 %v1329, %v1364
    %v1366 = vrcp.pop %v1346
    %v1367 = vmul.f32 %v1330, %v1366
    %v1368 = vrcp.pop %v1347
    %v1369 = vmul.f32 %v1331, %v1368
    %v1370 = vrcp.pop %v1348
    %v1371 = vmul.f32 %v1332, %v1370
    %v1372 = vrcp.pop %v1349
    %v1373 = vmul.f32 %v1333, %v1372
    %v1374 = vrcp.pop %v1350
    %v1375 = vmul.f32 %v1334, %v1374
    %v1376 = vrcp.pop %v1351
    %v1377 = vmul.f32 %v1335, %v1376
    %v1378 = vrcp.pop %v1352
    %v1379 = vmul.f32 %v1336, %v1378
    %v1380 = vrcp.pop %v1353
    %v1381 = vmul.f32 %v1337, %v1380
    %v1382 = vrcp.pop %v1354
    %v1383 = vmul.f32 %v1338, %v1382
    %v1384 = vrcp.pop %v1355
    %v1385 = vmul.f32 %v1339, %v1384
    %v1386 = vrcp.pop %v1356
    %v1387 = vmul.f32 %v1340, %v1386
    %v1388 = vrcp.pop %v1357
    %v1389 = vmul.f32 %v1341, %v1388
    %vm1390 = vcmp.lt.s32.totalorder %v397, 8
    %vm1391 = vcmp.lt.s32.totalorder %v398, 8
    %vm1392 = vcmp.lt.s32.totalorder %v399, 8
    %vm1393 = vcmp.lt.s32.totalorder %v400, 8
    %vm1394 = vcmp.lt.s32.totalorder %v401, 8
    %vm1395 = vcmp.lt.s32.totalorder %v402, 8
    %vm1396 = vcmp.lt.s32.totalorder %v403, 8
    %vm1397 = vcmp.lt.s32.totalorder %v404, 8
    %vm1398 = vcmp.lt.s32.totalorder %v405, 8
    %vm1399 = vcmp.lt.s32.totalorder %v406, 8
    %vm1400 = vcmp.lt.s32.totalorder %v407, 8
    %vm1401 = vcmp.lt.s32.totalorder %v408, 8
    %vm1402 = vcmp.lt.s32.totalorder %v409, 8
    %vm1403 = vcmp.lt.s32.totalorder %v410, 8
    %vm1404 = vcmp.lt.s32.totalorder %v411, 8
    %vm1405 = vcmp.lt.s32.totalorder %v412, 8
    %v1406 = vsel %vm1390, 1.0, 0.0
    %v1407 = vsel %vm1391, 1.0, 0.0
    %v1408 = vsel %vm1392, 1.0, 0.0
    %v1409 = vsel %vm1393, 1.0, 0.0
    %v1410 = vsel %vm1394, 1.0, 0.0
    %v1411 = vsel %vm1395, 1.0, 0.0
    %v1412 = vsel %vm1396, 1.0, 0.0
    %v1413 = vsel %vm1397, 1.0, 0.0
    %v1414 = vsel %vm1398, 1.0, 0.0
    %v1415 = vsel %vm1399, 1.0, 0.0
    %v1416 = vsel %vm1400, 1.0, 0.0
    %v1417 = vsel %vm1401, 1.0, 0.0
    %v1418 = vsel %vm1402, 1.0, 0.0
    %v1419 = vsel %vm1403, 1.0, 0.0
    %v1420 = vsel %vm1404, 1.0, 0.0
    %v1421 = vsel %vm1405, 1.0, 0.0
    %v1422 = vsub.f32 0.0, %v1359
    %v1423 = vsub.f32 0.0, %v1361
    %v1424 = vsub.f32 0.0, %v1363
    %v1425 = vsub.f32 0.0, %v1365
    %v1426 = vsub.f32 0.0, %v1367
    %v1427 = vsub.f32 0.0, %v1369
    %v1428 = vsub.f32 0.0, %v1371
    %v1429 = vsub.f32 0.0, %v1373
    %v1430 = vsub.f32 0.0, %v1375
    %v1431 = vsub.f32 0.0, %v1377
    %v1432 = vsub.f32 0.0, %v1379
    %v1433 = vsub.f32 0.0, %v1381
    %v1434 = vsub.f32 0.0, %v1383
    %v1435 = vsub.f32 0.0, %v1385
    %v1436 = vsub.f32 0.0, %v1387
    %v1437 = vsub.f32 0.0, %v1389
    %v1438 = vsub.f32 1.0, %v1198
    %v1439 = vsub.f32 1.0, %v1199
    %v1440 = vsub.f32 1.0, %v1200
    %v1441 = vsub.f32 1.0, %v1201
    %v1442 = vsub.f32 1.0, %v1202
    %v1443 = vsub.f32 1.0, %v1203
    %v1444 = vsub.f32 1.0, %v1204
    %v1445 = vsub.f32 1.0, %v1205
    %v1446 = vsub.f32 1.0, %v1206
    %v1447 = vsub.f32 1.0, %v1207
    %v1448 = vsub.f32 1.0, %v1208
    %v1449 = vsub.f32 1.0, %v1209
    %v1450 = vsub.f32 1.0, %v1210
    %v1451 = vsub.f32 1.0, %v1211
    %v1452 = vsub.f32 1.0, %v1212
    %v1453 = vsub.f32 1.0, %v1213
    %v1454 = vmul.f32 %v1422, %v1438
    %v1455 = vmul.f32 %v1423, %v1439
    %v1456 = vmul.f32 %v1424, %v1440
    %v1457 = vmul.f32 %v1425, %v1441
    %v1458 = vmul.f32 %v1426, %v1442
    %v1459 = vmul.f32 %v1427, %v1443
    %v1460 = vmul.f32 %v1428, %v1444
    %v1461 = vmul.f32 %v1429, %v1445
    %v1462 = vmul.f32 %v1430, %v1446
    %v1463 = vmul.f32 %v1431, %v1447
    %v1464 = vmul.f32 %v1432, %v1448
    %v1465 = vmul.f32 %v1433, %v1449
    %v1466 = vmul.f32 %v1434, %v1450
    %v1467 = vmul.f32 %v1435, %v1451
    %v1468 = vmul.f32 %v1436, %v1452
    %v1469 = vmul.f32 %v1437, %v1453
    %v1470 = vmul.f32 %v1454, %v1406
    %v1471 = vmul.f32 %v1455, %v1407
    %v1472 = vmul.f32 %v1456, %v1408
    %v1473 = vmul.f32 %v1457, %v1409
    %v1474 = vmul.f32 %v1458, %v1410
    %v1475 = vmul.f32 %v1459, %v1411
    %v1476 = vmul.f32 %v1460, %v1412
    %v1477 = vmul.f32 %v1461, %v1413
    %v1478 = vmul.f32 %v1462, %v1414
    %v1479 = vmul.f32 %v1463, %v1415
    %v1480 = vmul.f32 %v1464, %v1416
    %v1481 = vmul.f32 %v1465, %v1417
    %v1482 = vmul.f32 %v1466, %v1418
    %v1483 = vmul.f32 %v1467, %v1419
    %v1484 = vmul.f32 %v1468, %v1420
    %v1485 = vmul.f32 %v1469, %v1421
    %1486 = vst.msk [vmem:[%s4] sm:$0xff] %vm954, %v1470
    %1487 = vst.msk [vmem:[%s4 + $0x8] sm:$0xff] %vm954, %v1471
    %1488 = vst.msk [vmem:[%s4 + $0x10] sm:$0xff] %vm954, %v1472
    %1489 = vst.msk [vmem:[%s4 + $0x18] sm:$0xff] %vm954, %v1473
    %1490 = vst.msk [vmem:[%s4 + $0x20] sm:$0xff] %vm954, %v1474
    %1491 = vst.msk [vmem:[%s4 + $0x28] sm:$0xff] %vm954, %v1475
    %1492 = vst.msk [vmem:[%s4 + $0x30] sm:$0xff] %vm954, %v1476
    %1493 = vst.msk [vmem:[%s4 + $0x38] sm:$0xff] %vm954, %v1477
    %1494 = vst.msk [vmem:[%s4 + $0x40] sm:$0xff] %vm954, %v1478
    %1495 = vst.msk [vmem:[%s4 + $0x48] sm:$0xff] %vm954, %v1479
    %1496 = vst.msk [vmem:[%s4 + $0x50] sm:$0xff] %vm954, %v1480
    %1497 = vst.msk [vmem:[%s4 + $0x58] sm:$0xff] %vm954, %v1481
    %1498 = vst.msk [vmem:[%s4 + $0x60] sm:$0xff] %vm954, %v1482
    %1499 = vst.msk [vmem:[%s4 + $0x68] sm:$0xff] %vm954, %v1483
    %1500 = vst.msk [vmem:[%s4 + $0x70] sm:$0xff] %vm954, %v1484
    %1501 = vst.msk [vmem:[%s4 + $0x78] sm:$0xff] %vm954, %v1485
    %v1502 = vmul.f32 %v1198, %v1406
    %v1503 = vmul.f32 %v1199, %v1407
    %v1504 = vmul.f32 %v1200, %v1408
    %v1505 = vmul.f32 %v1201, %v1409
    %v1506 = vmul.f32 %v1202, %v1410
    %v1507 = vmul.f32 %v1203, %v1411
    %v1508 = vmul.f32 %v1204, %v1412
    %v1509 = vmul.f32 %v1205, %v1413
    %v1510 = vmul.f32 %v1206, %v1414
    %v1511 = vmul.f32 %v1207, %v1415
    %v1512 = vmul.f32 %v1208, %v1416
    %v1513 = vmul.f32 %v1209, %v1417
    %v1514 = vmul.f32 %v1210, %v1418
    %v1515 = vmul.f32 %v1211, %v1419
    %v1516 = vmul.f32 %v1212, %v1420
    %v1517 = vmul.f32 %v1213, %v1421
    %1518 = vst.msk [vmem:[%s5] sm:$0xff] %vm954, %v1502
    %1519 = vst.msk [vmem:[%s5 + $0x8] sm:$0xff] %vm954, %v1503
    %1520 = vst.msk [vmem:[%s5 + $0x10] sm:$0xff] %vm954, %v1504
    %1521 = vst.msk [vmem:[%s5 + $0x18] sm:$0xff] %vm954, %v1505
    %1522 = vst.msk [vmem:[%s5 + $0x20] sm:$0xff] %vm954, %v1506
    %1523 = vst.msk [vmem:[%s5 + $0x28] sm:$0xff] %vm954, %v1507
    %1524 = vst.msk [vmem:[%s5 + $0x30] sm:$0xff] %vm954, %v1508
    %1525 = vst.msk [vmem:[%s5 + $0x38] sm:$0xff] %vm954, %v1509
    %1526 = vst.msk [vmem:[%s5 + $0x40] sm:$0xff] %vm954, %v1510
    %1527 = vst.msk [vmem:[%s5 + $0x48] sm:$0xff] %vm954, %v1511
    %1528 = vst.msk [vmem:[%s5 + $0x50] sm:$0xff] %vm954, %v1512
    %1529 = vst.msk [vmem:[%s5 + $0x58] sm:$0xff] %vm954, %v1513
    %1530 = vst.msk [vmem:[%s5 + $0x60] sm:$0xff] %vm954, %v1514
    %1531 = vst.msk [vmem:[%s5 + $0x68] sm:$0xff] %vm954, %v1515
    %1532 = vst.msk [vmem:[%s5 + $0x70] sm:$0xff] %vm954, %v1516
    %1533 = vst.msk [vmem:[%s5 + $0x78] sm:$0xff] %vm954, %v1517
  $region25: #{tpu_custom_call.1} parent=0 // pred_fallthru
    _
  // Predicated region
  $region26: #{tpu_custom_call.1} parent=0 // pred_check
    _
  $region27: #{tpu_custom_call.1} parent=0 // pred_check_branch
    %1535 = sbr.rel (0) target = $region29
  $region28: #{tpu_custom_call.1} parent=0 // pred_region
    _
  $region29: #{tpu_custom_call.1} parent=0 // pred_fallthru
    _
  // Predicated region
  $region30: #{tpu_custom_call.1} parent=0 // pred_check
    _
  $region31: #{tpu_custom_call.1} parent=0 // pred_check_branch
    %1537 = sbr.rel (0) target = $region33
  $region32: #{tpu_custom_call.1} parent=0 // pred_region
    _
  $region33: #{tpu_custom_call.1} parent=0 // pred_fallthru
    _
  // Predicated region
  $region34: #{tpu_custom_call.1} parent=0 // pred_check
    _
  $region35: #{tpu_custom_call.1} parent=0 // pred_check_branch
    %1539 = sbr.rel (0) target = $region37
  $region36: #{tpu_custom_call.1} parent=0 // pred_region
    _
  $region37: #{tpu_custom_call.1} parent=0 // pred_fallthru
    _
  // Predicated region
  $region38: #{tpu_custom_call.1} parent=0 // pred_check
    _
  $region39: #{tpu_custom_call.1} parent=0 // pred_check_branch
    %1541 = sbr.rel (0) target = $region41
  $region40: #{tpu_custom_call.1} parent=0 // pred_region
    _
  $region41: #{tpu_custom_call.1} parent=0 // pred_fallthru
    _

</llo_original>
